<compile_context>
chip_gen: v7x
topology: tpu7x:2x2x1
jax: 0.10.0
libtpu: 0.0.40
codegen_flags: <defaults>
</compile_context>

<pallas_src>
import jax
import jax.numpy as jnp
from jax.experimental import pallas as pl
from jax.experimental.pallas import tpu as pltpu

# ---------------- hyper-parameters (mirror Modelseq2seq.__init__) ------------
B = 2            # batch
C_IN = 4         # input channels
WIDTH = 18       # sequence length seen by Conv1d (== "width" of input_shape)
K1, C1 = 3, 8    # conv_1_kernel, conv_1_filter
K2, C2 = 2, 8    # conv_2_kernel, conv_2_filter
H1 = 32          # lstm_1_units
H2 = 32          # lstm_2_units
P = 4            # predict_steps
EPS = 1e-5

L1 = WIDTH                 # conv1 'same' keeps length        (18)
LP1 = L1 // 2              # after MaxPool1d(2)               (9)
LC2 = LP1 - K2 + 1         # after conv2 (valid)              (8)
L2 = LC2 // 2              # after MaxPool1d(2)               (4)
assert L2 == WIDTH // 4, "shapes must satisfy the lstm1 input-size constraint"
assert 4 * H1 == P * H1 == 4 * H2 == 128, "packing assumes 128-lane slabs"
assert K1 * C_IN <= 16, "conv1 im2col weights must fit before the conv2 block"

# ------------- row offsets inside the single (R_TOTAL, 128) weight slab ------
R_W1 = 0          # K1*C_IN = 12 rows, lanes 0:C1 : conv1 im2col weights
R_W2 = 16         # K2*C1  = 16 rows, lanes 0:C2 : conv2 im2col weights
R_BN = 32         # 4 rows (s1, b1, s2, b2), lanes 0:C1 : folded BN + conv bias
R_WIH1 = 40       # 32 rows : LSTM1 W_ih, (t,c)-ordered rows, cols [i, o, g, 0]
R_B1 = 72         # 1 row   : LSTM1 b_ih + b_hh, cols [i, o, g, 0]
R_WREP = 80       # 32 rows : repeat Linear W^T
R_BREP = 112      # 1 row   : repeat Linear bias
R_WXH2 = 120      # 32 rows : LSTM2 W_ih^T, cols [i, f, o, g]
R_WHH2 = 152      # 32 rows : LSTM2 W_hh^T, cols [i, f, o, g]
R_B2 = 184        # 1 row   : LSTM2 b_ih + b_hh, cols [i, f, o, g]
R_WOUT = 192      # 32 rows : output Linear W^T, lanes 0:2 (rest zero)
R_BOUT = 224      # 1 row   : output Linear bias, lanes 0:2 (rest zero)
R_TOTAL = 232


# ------------------------------- kernel --------------------------------------
def seq2seq_kernel(cols1_ref, w_ref, out_ref):
    f32 = jnp.float32

    def sigmoid(v):
        # exact sigmoid via tanh: runs on the EUP slot, no divide.
        return 0.5 * jnp.tanh(0.5 * v) + 0.5

    # ---- conv1 ('same', wrapper-side im2col) + folded BN + ReLU: whole batch -
    w1 = w_ref[R_W1:R_W1 + K1 * C_IN, 0:C1]                        # (12, 8)
    bn_s1 = w_ref[R_BN + 0:R_BN + 1, 0:C1]
    bn_b1 = w_ref[R_BN + 1:R_BN + 2, 0:C1]
    bn_s2 = w_ref[R_BN + 2:R_BN + 3, 0:C2]
    bn_b2 = w_ref[R_BN + 3:R_BN + 4, 0:C2]

    h1 = jnp.dot(cols1_ref[...], w1, preferred_element_type=f32)   # (B*L1, C1)
    h1 = jnp.maximum(h1 * bn_s1 + bn_b1, 0.0)

    # ---- pool1 (MaxPool1d(2)), batched: L1 even so batches never mix --------
    p1 = jnp.max(h1.reshape(B * LP1, 2, C1), axis=1)               # (B*LP1, C1)

    # ---- conv2 (valid): ONE batched im2col matmul + folded BN + ReLU --------
    cols2 = []
    for b in range(B):                                             # B == 2, unrolled
        pb = p1[b * LP1:(b + 1) * LP1, :]                          # (LP1, C1)
        cols2.append(jnp.concatenate([pb[k:k + LC2, :] for k in range(K2)],
                                     axis=1))                      # (LC2, K2*C1)
    c2 = jnp.concatenate(cols2, axis=0)                            # (B*LC2, 16)
    w2 = w_ref[R_W2:R_W2 + K2 * C1, 0:C2]                          # (16, 8)
    h2 = jnp.maximum(jnp.dot(c2, w2, preferred_element_type=f32) * bn_s2 + bn_b2,
                     0.0)                                          # (B*LC2, C2)

    # ---- pool2 + flatten in (t, c) order -------------------------------------
    p2 = jnp.max(h2.reshape(B * L2, 2, C2), axis=1)                # (B*L2, C2)
    rows = []
    for b in range(B):
        pb = p2[b * L2:(b + 1) * L2, :]                            # (L2, C2)
        rows.append(jnp.concatenate([pb[t:t + 1, :] for t in range(L2)], axis=1))
    flat = jnp.concatenate(rows, axis=0)                           # (B, L2*C2) = (2, 32)

    # ---- LSTM1: one time step, h0 = c0 = 0 => f-gate and W_hh contribute 0 ---
    # TODO(synk): this shortcut only holds for seq_len == 1 with zero init state.
    wih1 = w_ref[R_WIH1:R_WIH1 + L2 * C2, :]                       # (32, 128) [i,o,g,0]
    b1g = w_ref[R_B1:R_B1 + 1, :]                                  # (1, 128)
    g1 = jnp.dot(flat, wih1, preferred_element_type=f32) + b1g     # (B, 128)
    sg1 = sigmoid(g1[:, 0:2 * H1])                                 # [sig(i), sig(o)]
    tg1 = jnp.tanh(g1[:, 2 * H1:3 * H1])                           # tanh(g)
    c1 = sg1[:, 0:H1] * tg1
    hl1 = sg1[:, H1:2 * H1] * jnp.tanh(c1)                         # (B, H1)

    # ---- repeat Linear --------------------------------------------------------
    wrep = w_ref[R_WREP:R_WREP + H1, :]                            # (32, 128)
    brep = w_ref[R_BREP:R_BREP + 1, :]
    seq = jnp.dot(hl1, wrep, preferred_element_type=f32) + brep    # (B, P*H1)

    # ---- LSTM2: precompute x-gates for ALL steps off the recurrence chain ----
    wxh2 = w_ref[R_WXH2:R_WXH2 + H1, :]                            # (32, 128) [i,f,o,g]
    whh2 = w_ref[R_WHH2:R_WHH2 + H2, :]                            # (32, 128) [i,f,o,g]
    b2g = w_ref[R_B2:R_B2 + 1, :]                                  # (1, 128)

    # rows ordered (p, b): row = p*B + b
    x_all = jnp.concatenate([seq[:, p * H1:(p + 1) * H1] for p in range(P)],
                            axis=0)                                # (P*B, H1)
    xg_all = jnp.dot(x_all, wxh2, preferred_element_type=f32) + b2g  # (P*B, 128)

    hs = []
    # step 0: h = c = 0 => W_hh term and f*c vanish
    g = xg_all[0:B, :]
    sg = sigmoid(g[:, 0:3 * H2])                                   # [i, f, o]
    gg = jnp.tanh(g[:, 3 * H2:4 * H2])                             # g
    c = sg[:, 0:H2] * gg
    h = sg[:, 2 * H2:3 * H2] * jnp.tanh(c)
    hs.append(h)
    for p in range(1, P):                                          # P == 4, unrolled
        g = xg_all[p * B:(p + 1) * B, :] + jnp.dot(h, whh2,
                                                   preferred_element_type=f32)
        sg = sigmoid(g[:, 0:3 * H2])                               # one 96-lane sigmoid
        gg = jnp.tanh(g[:, 3 * H2:4 * H2])
        c = sg[:, H2:2 * H2] * c + sg[:, 0:H2] * gg
        h = sg[:, 2 * H2:3 * H2] * jnp.tanh(c)
        hs.append(h)

    # ---- batched output projection + single lane-dense (8,128) store ---------
    h_all = jnp.concatenate(hs, axis=0)                            # (P*B, H2)
    wo = w_ref[R_WOUT:R_WOUT + H2, :]                              # (32, 128), lanes 0:2 real
    bo = w_ref[R_BOUT:R_BOUT + 1, :]                               # (1, 128)
    out_ref[...] = (jnp.dot(h_all, wo, preferred_element_type=f32)
                    + bo).astype(out_ref.dtype)                    # (P*B, 128)


# ------------------------- parameter construction ----------------------------
def build_params(key):
    ks = jax.random.split(key, 24)
    u = lambda k, shape, lo=-0.1, hi=0.1: jax.random.uniform(k, shape, jnp.float32, lo, hi)
    p = {}
    p['conv1_w'] = u(ks[0], (C1, C_IN, K1)); p['conv1_b'] = u(ks[1], (C1,))
    p['bn1_gamma'] = u(ks[2], (C1,), 0.8, 1.2); p['bn1_beta'] = u(ks[3], (C1,))
    p['bn1_mean'] = u(ks[4], (C1,)); p['bn1_var'] = u(ks[5], (C1,), 0.5, 1.5)
    p['conv2_w'] = u(ks[6], (C2, C1, K2)); p['conv2_b'] = u(ks[7], (C2,))
    p['bn2_gamma'] = u(ks[8], (C2,), 0.8, 1.2); p['bn2_beta'] = u(ks[9], (C2,))
    p['bn2_mean'] = u(ks[10], (C2,)); p['bn2_var'] = u(ks[11], (C2,), 0.5, 1.5)
    p['lstm1_wih'] = u(ks[12], (4 * H1, C2 * L2)); p['lstm1_bih'] = u(ks[13], (4 * H1,))
    p['lstm1_whh'] = u(ks[14], (4 * H1, H1));      p['lstm1_bhh'] = u(ks[15], (4 * H1,))
    p['rep_w'] = u(ks[16], (P * H1, H1)); p['rep_b'] = u(ks[17], (P * H1,))
    p['lstm2_wih'] = u(ks[18], (4 * H2, H1)); p['lstm2_bih'] = u(ks[19], (4 * H2,))
    p['lstm2_whh'] = u(ks[20], (4 * H2, H2)); p['lstm2_bhh'] = u(ks[21], (4 * H2,))
    p['out_w'] = u(ks[22], (2, H2)); p['out_b'] = u(ks[23], (2,))
    return p


def pack_for_kernel(p):
    """Pack all 16 parameter tensors into one (R_TOTAL, 128) f32 slab."""
    f32 = jnp.float32
    # im2col conv weights: W[k*Cin + c, o] = conv_w[o, c, k]
    w1col = jnp.transpose(p['conv1_w'], (2, 1, 0)).reshape(K1 * C_IN, C1)
    w2col = jnp.transpose(p['conv2_w'], (2, 1, 0)).reshape(K2 * C1, C2)
    # fold conv bias + BatchNorm(eval) into per-channel scale/shift
    s1 = p['bn1_gamma'] / jnp.sqrt(p['bn1_var'] + EPS)
    b1 = p['bn1_beta'] + (p['conv1_b'] - p['bn1_mean']) * s1
    s2 = p['bn2_gamma'] / jnp.sqrt(p['bn2_var'] + EPS)
    b2 = p['bn2_beta'] + (p['conv2_b'] - p['bn2_mean']) * s2

    # LSTM1 W_ih: reindex columns from PyTorch flatten (c*L2 + t) to (t*C2 + c),
    # transpose to (input, gate*H1); PyTorch gate order rows are [i, f, g, o].
    wih1_full = (p['lstm1_wih'].reshape(4, H1, C2, L2)
                 .transpose(3, 2, 0, 1).reshape(L2 * C2, 4 * H1))    # cols [i|f|g|o]
    b1_full = p['lstm1_bih'] + p['lstm1_bhh']
    # reorder columns to [i, o, g, 0] so sigmoid gates are contiguous
    wih1 = jnp.concatenate([wih1_full[:, 0:H1], wih1_full[:, 3 * H1:4 * H1],
                            wih1_full[:, 2 * H1:3 * H1],
                            jnp.zeros((L2 * C2, H1), f32)], axis=1)
    b1g = jnp.concatenate([b1_full[0:H1], b1_full[3 * H1:4 * H1],
                           b1_full[2 * H1:3 * H1], jnp.zeros((H1,), f32)])

    wrep = p['rep_w'].T                                              # (32, 128)
    brep = p['rep_b']

    def reord2(w):  # last-axis gate order [i|f|g|o] -> [i|f|o|g]
        return jnp.concatenate([w[..., 0:2 * H2], w[..., 3 * H2:4 * H2],
                                w[..., 2 * H2:3 * H2]], axis=-1)
    wxh2 = reord2(p['lstm2_wih'].T)                                  # (32, 128)
    whh2 = reord2(p['lstm2_whh'].T)                                  # (32, 128)
    b2g = reord2(p['lstm2_bih'] + p['lstm2_bhh'])                    # (128,)

    wout = jnp.zeros((H2, 128), f32).at[:, 0:2].set(p['out_w'].T)    # lane-padded
    bout = jnp.zeros((128,), f32).at[0:2].set(p['out_b'])

    slab = jnp.zeros((R_TOTAL, 128), f32)
    slab = slab.at[R_W1:R_W1 + K1 * C_IN, 0:C1].set(w1col)
    slab = slab.at[R_W2:R_W2 + K2 * C1, 0:C2].set(w2col)
    slab = slab.at[R_BN + 0, 0:C1].set(s1)
    slab = slab.at[R_BN + 1, 0:C1].set(b1)
    slab = slab.at[R_BN + 2, 0:C2].set(s2)
    slab = slab.at[R_BN + 3, 0:C2].set(b2)
    slab = slab.at[R_WIH1:R_WIH1 + L2 * C2, :].set(wih1)
    slab = slab.at[R_B1, :].set(b1g)
    slab = slab.at[R_WREP:R_WREP + H1, :].set(wrep)
    slab = slab.at[R_BREP, :].set(brep)
    slab = slab.at[R_WXH2:R_WXH2 + H1, :].set(wxh2)
    slab = slab.at[R_WHH2:R_WHH2 + H2, :].set(whh2)
    slab = slab.at[R_B2, :].set(b2g)
    slab = slab.at[R_WOUT:R_WOUT + H2, :].set(wout)
    slab = slab.at[R_BOUT, :].set(bout)
    return slab


# --------------------------------- wrapper -----------------------------------
@jax.jit
def seq2seq_forward(x, slab):
    # NCL -> channels-last, 'same' padding and conv1 im2col are pure layout
    # plumbing (no FLOPs); all multiply/accumulate work stays in the kernel.
    lpad = (K1 - 1) // 2
    rpad = (K1 - 1) - lpad
    xcl = jnp.pad(jnp.transpose(x, (0, 2, 1)).astype(jnp.float32),
                  ((0, 0), (lpad, rpad), (0, 0)))                    # (B, L1+K1-1, C_IN)
    cols1 = jnp.concatenate([xcl[:, k:k + L1, :] for k in range(K1)],
                            axis=2).reshape(B * L1, K1 * C_IN)       # (B*L1, K1*C_IN)

    grid_spec = pltpu.PrefetchScalarGridSpec(
        num_scalar_prefetch=0,
        grid=(1,),                      # single step: whole batch handled in-kernel
        in_specs=[pl.BlockSpec((B * L1, K1 * C_IN), lambda i: (0, 0)),
                  pl.BlockSpec((R_TOTAL, 128), lambda i: (0, 0))],
        out_specs=pl.BlockSpec((P * B, 128), lambda i: (0, 0)))

    raw = pl.pallas_call(
        seq2seq_kernel,
        out_shape=jax.ShapeDtypeStruct((P * B, 128), jnp.float32),   # lane-dense output
        grid_spec=grid_spec,
        compiler_params=pltpu.CompilerParams(dimension_semantics=("arbitrary",)),
    )(cols1, slab)

    # kernel rows are (p, b); real predictions live in lanes 0:2
    return jnp.transpose(raw[:, 0:2].reshape(P, B, 2), (1, 0, 2))    # (B, P, 2)


# ---------------------- pure-JAX reference (PyTorch semantics) ----------------
def reference_forward(x, p):
    x = x.astype(jnp.float32)
    sig = lambda v: 1.0 / (1.0 + jnp.exp(-v))
    xp = jnp.pad(x, ((0, 0), (0, 0), (1, 1)))
    y1 = sum(jnp.einsum('oc,bct->bot', p['conv1_w'][:, :, k], xp[:, :, k:k + L1])
             for k in range(K1)) + p['conv1_b'][None, :, None]
    y1 = ((y1 - p['bn1_mean'][None, :, None]) / jnp.sqrt(p['bn1_var'] + EPS)[None, :, None]
          * p['bn1_gamma'][None, :, None] + p['bn1_beta'][None, :, None])
    y1 = jnp.maximum(y1, 0.0).reshape(B, C1, LP1, 2).max(axis=-1)
    y2 = sum(jnp.einsum('oc,bct->bot', p['conv2_w'][:, :, k], y1[:, :, k:k + LC2])
             for k in range(K2)) + p['conv2_b'][None, :, None]
    y2 = ((y2 - p['bn2_mean'][None, :, None]) / jnp.sqrt(p['bn2_var'] + EPS)[None, :, None]
          * p['bn2_gamma'][None, :, None] + p['bn2_beta'][None, :, None])
    y2 = jnp.maximum(y2, 0.0).reshape(B, C2, L2, 2).max(axis=-1)
    flat = y2.reshape(B, C2 * L2)
    gates = flat @ p['lstm1_wih'].T + p['lstm1_bih'] + p['lstm1_bhh']
    i1 = sig(gates[:, 0:H1]); g1 = jnp.tanh(gates[:, 2 * H1:3 * H1]); o1 = sig(gates[:, 3 * H1:])
    h1 = o1 * jnp.tanh(i1 * g1)
    seq = (h1 @ p['rep_w'].T + p['rep_b']).reshape(B, P, H1)
    h = jnp.zeros((B, H2)); c = jnp.zeros((B, H2)); outs = []
    for t in range(P):
        g = (seq[:, t, :] @ p['lstm2_wih'].T + h @ p['lstm2_whh'].T
             + p['lstm2_bih'] + p['lstm2_bhh'])
        i = sig(g[:, 0:H2]); f = sig(g[:, H2:2 * H2])
        gg = jnp.tanh(g[:, 2 * H2:3 * H2]); o = sig(g[:, 3 * H2:])
        c = f * c + i * gg
        h = o * jnp.tanh(c)
        outs.append(h @ p['out_w'].T + p['out_b'])
    return jnp.stack(outs, axis=1)


if __name__ == "__main__":
    key = jax.random.PRNGKey(0)
    kx, kp = jax.random.split(key)
    x = jax.random.uniform(kx, (B, C_IN, WIDTH), jnp.float32, -1.0, 1.0)
    params = build_params(kp)
    slab = pack_for_kernel(params)

    out = jax.block_until_ready(seq2seq_forward(x, slab))
    assert out.shape == (B, P, 2), out.shape

    ref = reference_forward(x, params)
    max_diff = float(jnp.max(jnp.abs(out - ref)))
    if max_diff > 1e-3:
        raise AssertionError(f"Pallas kernel mismatch vs reference: {max_diff}")
    print("KERNEL_OK")
</pallas_src>

<mosaic_0001>
module attributes {stable_mosaic.version = 11 : i64} {
  func.func @seq2seq_kernel(%arg0: i32, %arg1: memref<36x12xf32, #tpu.memory_space<vmem>>, %arg2: memref<232x128xf32, #tpu.memory_space<vmem>>, %arg3: memref<8x128xf32, #tpu.memory_space<vmem>>) attributes {dimension_semantics = [#tpu.dimension_semantics<arbitrary>], iteration_bounds = array<i64: 1>, scalar_prefetch = 0 : i64, scratch_operands = 0 : i64, tpu.core_type = #tpu.core_type<tc>, window_params = [{pipeline_mode = #tpu.pipeline_mode<synchronous>, transform_indices = @transform_0, window_bounds = array<i64: 36, 12>}, {pipeline_mode = #tpu.pipeline_mode<synchronous>, transform_indices = @transform_1, window_bounds = array<i64: 232, 128>}, {pipeline_mode = #tpu.pipeline_mode<synchronous>, transform_indices = @transform_2, window_bounds = array<i64: 8, 128>}]} {
    %c0 = arith.constant 0 : index
    %c0_0 = arith.constant 0 : index
    %0 = vector.load %arg2[%c0, %c0_0] : memref<232x128xf32, #tpu.memory_space<vmem>>, vector<12x8xf32>
    %c32 = arith.constant 32 : index
    %c0_1 = arith.constant 0 : index
    %1 = vector.load %arg2[%c32, %c0_1] : memref<232x128xf32, #tpu.memory_space<vmem>>, vector<1x8xf32>
    %c33 = arith.constant 33 : index
    %c0_2 = arith.constant 0 : index
    %2 = vector.load %arg2[%c33, %c0_2] : memref<232x128xf32, #tpu.memory_space<vmem>>, vector<1x8xf32>
    %c34 = arith.constant 34 : index
    %c0_3 = arith.constant 0 : index
    %3 = vector.load %arg2[%c34, %c0_3] : memref<232x128xf32, #tpu.memory_space<vmem>>, vector<1x8xf32>
    %c35 = arith.constant 35 : index
    %c0_4 = arith.constant 0 : index
    %4 = vector.load %arg2[%c35, %c0_4] : memref<232x128xf32, #tpu.memory_space<vmem>>, vector<1x8xf32>
    %c0_5 = arith.constant 0 : index
    %c0_6 = arith.constant 0 : index
    %5 = vector.load %arg1[%c0_5, %c0_6] : memref<36x12xf32, #tpu.memory_space<vmem>>, vector<36x12xf32>
    %cst = arith.constant dense<0.000000e+00> : vector<36x8xf32>
    %6 = tpu.matmul %5, %0, %cst {dimension_numbers = #tpu.dot_dimension_numbers<[1], [0], [0], [1], [0, 0, 1, 1], [], []>} : vector<36x12xf32>, vector<12x8xf32>, vector<36x8xf32> -> vector<36x8xf32>
    %7 = vector.broadcast %1 : vector<1x8xf32> to vector<36x8xf32>
    %8 = arith.mulf %6, %7 : vector<36x8xf32>
    %9 = vector.broadcast %2 : vector<1x8xf32> to vector<36x8xf32>
    %10 = arith.addf %8, %9 : vector<36x8xf32>
    %cst_7 = arith.constant 0.000000e+00 : f32
    %11 = vector.broadcast %cst_7 : f32 to vector<36x8xf32>
    %12 = arith.maximumf %10, %11 : vector<36x8xf32>
    %13 = vector.shape_cast %12 : vector<36x8xf32> to vector<18x2x8xf32>
    %cst_8 = arith.constant dense<0xFF800000> : vector<18x8xf32>
    %14 = vector.multi_reduction <maximumf>, %13, %cst_8 [1] : vector<18x2x8xf32> to vector<18x8xf32>
    %15 = vector.extract_strided_slice %14 {offsets = [0, 0], sizes = [9, 8], strides = [1, 1]} : vector<18x8xf32> to vector<9x8xf32>
    %16 = vector.extract_strided_slice %15 {offsets = [0, 0], sizes = [8, 8], strides = [1, 1]} : vector<9x8xf32> to vector<8x8xf32>
    %17 = vector.extract_strided_slice %15 {offsets = [1, 0], sizes = [8, 8], strides = [1, 1]} : vector<9x8xf32> to vector<8x8xf32>
    %18 = tpu.concatenate %16, %17 in 1 : vector<8x8xf32>, vector<8x8xf32> -> vector<8x16xf32>
    %19 = vector.extract_strided_slice %14 {offsets = [9, 0], sizes = [9, 8], strides = [1, 1]} : vector<18x8xf32> to vector<9x8xf32>
    %20 = vector.extract_strided_slice %19 {offsets = [0, 0], sizes = [8, 8], strides = [1, 1]} : vector<9x8xf32> to vector<8x8xf32>
    %21 = vector.extract_strided_slice %19 {offsets = [1, 0], sizes = [8, 8], strides = [1, 1]} : vector<9x8xf32> to vector<8x8xf32>
    %22 = tpu.concatenate %20, %21 in 1 : vector<8x8xf32>, vector<8x8xf32> -> vector<8x16xf32>
    %23 = tpu.concatenate %18, %22 in 0 : vector<8x16xf32>, vector<8x16xf32> -> vector<16x16xf32>
    %c16 = arith.constant 16 : index
    %c0_9 = arith.constant 0 : index
    %24 = vector.load %arg2[%c16, %c0_9] : memref<232x128xf32, #tpu.memory_space<vmem>>, vector<16x8xf32>
    %cst_10 = arith.constant dense<0.000000e+00> : vector<16x8xf32>
    %25 = tpu.matmul %23, %24, %cst_10 {dimension_numbers = #tpu.dot_dimension_numbers<[1], [0], [0], [1], [0, 0, 1, 1], [], []>} : vector<16x16xf32>, vector<16x8xf32>, vector<16x8xf32> -> vector<16x8xf32>
    %26 = vector.broadcast %3 : vector<1x8xf32> to vector<16x8xf32>
    %27 = arith.mulf %25, %26 : vector<16x8xf32>
    %28 = vector.broadcast %4 : vector<1x8xf32> to vector<16x8xf32>
    %29 = arith.addf %27, %28 : vector<16x8xf32>
    %cst_11 = arith.constant 0.000000e+00 : f32
    %30 = vector.broadcast %cst_11 : f32 to vector<16x8xf32>
    %31 = arith.maximumf %29, %30 : vector<16x8xf32>
    %32 = vector.shape_cast %31 : vector<16x8xf32> to vector<8x2x8xf32>
    %cst_12 = arith.constant dense<0xFF800000> : vector<8x8xf32>
    %33 = vector.multi_reduction <maximumf>, %32, %cst_12 [1] : vector<8x2x8xf32> to vector<8x8xf32>
    %34 = vector.extract_strided_slice %33 {offsets = [0, 0], sizes = [4, 8], strides = [1, 1]} : vector<8x8xf32> to vector<4x8xf32>
    %35 = vector.extract_strided_slice %34 {offsets = [0, 0], sizes = [1, 8], strides = [1, 1]} : vector<4x8xf32> to vector<1x8xf32>
    %36 = vector.extract_strided_slice %34 {offsets = [1, 0], sizes = [1, 8], strides = [1, 1]} : vector<4x8xf32> to vector<1x8xf32>
    %37 = vector.extract_strided_slice %34 {offsets = [2, 0], sizes = [1, 8], strides = [1, 1]} : vector<4x8xf32> to vector<1x8xf32>
    %38 = vector.extract_strided_slice %34 {offsets = [3, 0], sizes = [1, 8], strides = [1, 1]} : vector<4x8xf32> to vector<1x8xf32>
    %39 = tpu.concatenate %35, %36, %37, %38 in 1 : vector<1x8xf32>, vector<1x8xf32>, vector<1x8xf32>, vector<1x8xf32> -> vector<1x32xf32>
    %40 = vector.extract_strided_slice %33 {offsets = [4, 0], sizes = [4, 8], strides = [1, 1]} : vector<8x8xf32> to vector<4x8xf32>
    %41 = vector.extract_strided_slice %40 {offsets = [0, 0], sizes = [1, 8], strides = [1, 1]} : vector<4x8xf32> to vector<1x8xf32>
    %42 = vector.extract_strided_slice %40 {offsets = [1, 0], sizes = [1, 8], strides = [1, 1]} : vector<4x8xf32> to vector<1x8xf32>
    %43 = vector.extract_strided_slice %40 {offsets = [2, 0], sizes = [1, 8], strides = [1, 1]} : vector<4x8xf32> to vector<1x8xf32>
    %44 = vector.extract_strided_slice %40 {offsets = [3, 0], sizes = [1, 8], strides = [1, 1]} : vector<4x8xf32> to vector<1x8xf32>
    %45 = tpu.concatenate %41, %42, %43, %44 in 1 : vector<1x8xf32>, vector<1x8xf32>, vector<1x8xf32>, vector<1x8xf32> -> vector<1x32xf32>
    %46 = tpu.concatenate %39, %45 in 0 : vector<1x32xf32>, vector<1x32xf32> -> vector<2x32xf32>
    %c40 = arith.constant 40 : index
    %c0_13 = arith.constant 0 : index
    %47 = vector.load %arg2[%c40, %c0_13] : memref<232x128xf32, #tpu.memory_space<vmem>>, vector<32x128xf32>
    %c72 = arith.constant 72 : index
    %c0_14 = arith.constant 0 : index
    %48 = vector.load %arg2[%c72, %c0_14] : memref<232x128xf32, #tpu.memory_space<vmem>>, vector<1x128xf32>
    %cst_15 = arith.constant dense<0.000000e+00> : vector<2x128xf32>
    %49 = tpu.matmul %46, %47, %cst_15 {dimension_numbers = #tpu.dot_dimension_numbers<[1], [0], [0], [1], [0, 0, 1, 1], [], []>} : vector<2x32xf32>, vector<32x128xf32>, vector<2x128xf32> -> vector<2x128xf32>
    %50 = vector.broadcast %48 : vector<1x128xf32> to vector<2x128xf32>
    %51 = arith.addf %49, %50 : vector<2x128xf32>
    %52 = vector.extract_strided_slice %51 {offsets = [0, 0], sizes = [2, 64], strides = [1, 1]} : vector<2x128xf32> to vector<2x64xf32>
    %cst_16 = arith.constant 5.000000e-01 : f32
    %53 = vector.broadcast %cst_16 : f32 to vector<2x64xf32>
    %54 = arith.mulf %53, %52 : vector<2x64xf32>
    %55 = math.tanh %54 : vector<2x64xf32>
    %cst_17 = arith.constant 5.000000e-01 : f32
    %56 = vector.broadcast %cst_17 : f32 to vector<2x64xf32>
    %57 = arith.mulf %56, %55 : vector<2x64xf32>
    %cst_18 = arith.constant 5.000000e-01 : f32
    %58 = vector.broadcast %cst_18 : f32 to vector<2x64xf32>
    %59 = arith.addf %57, %58 : vector<2x64xf32>
    %60 = vector.extract_strided_slice %51 {offsets = [0, 64], sizes = [2, 32], strides = [1, 1]} : vector<2x128xf32> to vector<2x32xf32>
    %61 = math.tanh %60 : vector<2x32xf32>
    %62 = vector.extract_strided_slice %59 {offsets = [0, 0], sizes = [2, 32], strides = [1, 1]} : vector<2x64xf32> to vector<2x32xf32>
    %63 = arith.mulf %62, %61 : vector<2x32xf32>
    %64 = vector.extract_strided_slice %59 {offsets = [0, 32], sizes = [2, 32], strides = [1, 1]} : vector<2x64xf32> to vector<2x32xf32>
    %65 = math.tanh %63 : vector<2x32xf32>
    %66 = arith.mulf %64, %65 : vector<2x32xf32>
    %c80 = arith.constant 80 : index
    %c0_19 = arith.constant 0 : index
    %67 = vector.load %arg2[%c80, %c0_19] : memref<232x128xf32, #tpu.memory_space<vmem>>, vector<32x128xf32>
    %c112 = arith.constant 112 : index
    %c0_20 = arith.constant 0 : index
    %68 = vector.load %arg2[%c112, %c0_20] : memref<232x128xf32, #tpu.memory_space<vmem>>, vector<1x128xf32>
    %cst_21 = arith.constant dense<0.000000e+00> : vector<2x128xf32>
    %69 = tpu.matmul %66, %67, %cst_21 {dimension_numbers = #tpu.dot_dimension_numbers<[1], [0], [0], [1], [0, 0, 1, 1], [], []>} : vector<2x32xf32>, vector<32x128xf32>, vector<2x128xf32> -> vector<2x128xf32>
    %70 = vector.broadcast %68 : vector<1x128xf32> to vector<2x128xf32>
    %71 = arith.addf %69, %70 : vector<2x128xf32>
    %c120 = arith.constant 120 : index
    %c0_22 = arith.constant 0 : index
    %72 = vector.load %arg2[%c120, %c0_22] : memref<232x128xf32, #tpu.memory_space<vmem>>, vector<32x128xf32>
    %c152 = arith.constant 152 : index
    %c0_23 = arith.constant 0 : index
    %73 = vector.load %arg2[%c152, %c0_23] : memref<232x128xf32, #tpu.memory_space<vmem>>, vector<32x128xf32>
    %c184 = arith.constant 184 : index
    %c0_24 = arith.constant 0 : index
    %74 = vector.load %arg2[%c184, %c0_24] : memref<232x128xf32, #tpu.memory_space<vmem>>, vector<1x128xf32>
    %75 = vector.extract_strided_slice %71 {offsets = [0, 0], sizes = [2, 32], strides = [1, 1]} : vector<2x128xf32> to vector<2x32xf32>
    %76 = vector.extract_strided_slice %71 {offsets = [0, 32], sizes = [2, 32], strides = [1, 1]} : vector<2x128xf32> to vector<2x32xf32>
    %77 = vector.extract_strided_slice %71 {offsets = [0, 64], sizes = [2, 32], strides = [1, 1]} : vector<2x128xf32> to vector<2x32xf32>
    %78 = vector.extract_strided_slice %71 {offsets = [0, 96], sizes = [2, 32], strides = [1, 1]} : vector<2x128xf32> to vector<2x32xf32>
    %79 = tpu.concatenate %75, %76, %77, %78 in 0 : vector<2x32xf32>, vector<2x32xf32>, vector<2x32xf32>, vector<2x32xf32> -> vector<8x32xf32>
    %cst_25 = arith.constant dense<0.000000e+00> : vector<8x128xf32>
    %80 = tpu.matmul %79, %72, %cst_25 {dimension_numbers = #tpu.dot_dimension_numbers<[1], [0], [0], [1], [0, 0, 1, 1], [], []>} : vector<8x32xf32>, vector<32x128xf32>, vector<8x128xf32> -> vector<8x128xf32>
    %81 = vector.broadcast %74 : vector<1x128xf32> to vector<8x128xf32>
    %82 = arith.addf %80, %81 : vector<8x128xf32>
    %83 = vector.extract_strided_slice %82 {offsets = [0, 0], sizes = [2, 128], strides = [1, 1]} : vector<8x128xf32> to vector<2x128xf32>
    %84 = vector.extract_strided_slice %83 {offsets = [0, 0], sizes = [2, 96], strides = [1, 1]} : vector<2x128xf32> to vector<2x96xf32>
    %cst_26 = arith.constant 5.000000e-01 : f32
    %85 = vector.broadcast %cst_26 : f32 to vector<2x96xf32>
    %86 = arith.mulf %85, %84 : vector<2x96xf32>
    %87 = math.tanh %86 : vector<2x96xf32>
    %cst_27 = arith.constant 5.000000e-01 : f32
    %88 = vector.broadcast %cst_27 : f32 to vector<2x96xf32>
    %89 = arith.mulf %88, %87 : vector<2x96xf32>
    %cst_28 = arith.constant 5.000000e-01 : f32
    %90 = vector.broadcast %cst_28 : f32 to vector<2x96xf32>
    %91 = arith.addf %89, %90 : vector<2x96xf32>
    %92 = vector.extract_strided_slice %83 {offsets = [0, 96], sizes = [2, 32], strides = [1, 1]} : vector<2x128xf32> to vector<2x32xf32>
    %93 = math.tanh %92 : vector<2x32xf32>
    %94 = vector.extract_strided_slice %91 {offsets = [0, 0], sizes = [2, 32], strides = [1, 1]} : vector<2x96xf32> to vector<2x32xf32>
    %95 = arith.mulf %94, %93 : vector<2x32xf32>
    %96 = vector.extract_strided_slice %91 {offsets = [0, 64], sizes = [2, 32], strides = [1, 1]} : vector<2x96xf32> to vector<2x32xf32>
    %97 = math.tanh %95 : vector<2x32xf32>
    %98 = arith.mulf %96, %97 : vector<2x32xf32>
    %99 = vector.extract_strided_slice %82 {offsets = [2, 0], sizes = [2, 128], strides = [1, 1]} : vector<8x128xf32> to vector<2x128xf32>
    %cst_29 = arith.constant dense<0.000000e+00> : vector<2x128xf32>
    %100 = tpu.matmul %98, %73, %cst_29 {dimension_numbers = #tpu.dot_dimension_numbers<[1], [0], [0], [1], [0, 0, 1, 1], [], []>} : vector<2x32xf32>, vector<32x128xf32>, vector<2x128xf32> -> vector<2x128xf32>
    %101 = arith.addf %99, %100 : vector<2x128xf32>
    %102 = vector.extract_strided_slice %101 {offsets = [0, 0], sizes = [2, 96], strides = [1, 1]} : vector<2x128xf32> to vector<2x96xf32>
    %cst_30 = arith.constant 5.000000e-01 : f32
    %103 = vector.broadcast %cst_30 : f32 to vector<2x96xf32>
    %104 = arith.mulf %103, %102 : vector<2x96xf32>
    %105 = math.tanh %104 : vector<2x96xf32>
    %cst_31 = arith.constant 5.000000e-01 : f32
    %106 = vector.broadcast %cst_31 : f32 to vector<2x96xf32>
    %107 = arith.mulf %106, %105 : vector<2x96xf32>
    %cst_32 = arith.constant 5.000000e-01 : f32
    %108 = vector.broadcast %cst_32 : f32 to vector<2x96xf32>
    %109 = arith.addf %107, %108 : vector<2x96xf32>
    %110 = vector.extract_strided_slice %101 {offsets = [0, 96], sizes = [2, 32], strides = [1, 1]} : vector<2x128xf32> to vector<2x32xf32>
    %111 = math.tanh %110 : vector<2x32xf32>
    %112 = vector.extract_strided_slice %109 {offsets = [0, 32], sizes = [2, 32], strides = [1, 1]} : vector<2x96xf32> to vector<2x32xf32>
    %113 = arith.mulf %112, %95 : vector<2x32xf32>
    %114 = vector.extract_strided_slice %109 {offsets = [0, 0], sizes = [2, 32], strides = [1, 1]} : vector<2x96xf32> to vector<2x32xf32>
    %115 = arith.mulf %114, %111 : vector<2x32xf32>
    %116 = arith.addf %113, %115 : vector<2x32xf32>
    %117 = vector.extract_strided_slice %109 {offsets = [0, 64], sizes = [2, 32], strides = [1, 1]} : vector<2x96xf32> to vector<2x32xf32>
    %118 = math.tanh %116 : vector<2x32xf32>
    %119 = arith.mulf %117, %118 : vector<2x32xf32>
    %120 = vector.extract_strided_slice %82 {offsets = [4, 0], sizes = [2, 128], strides = [1, 1]} : vector<8x128xf32> to vector<2x128xf32>
    %cst_33 = arith.constant dense<0.000000e+00> : vector<2x128xf32>
    %121 = tpu.matmul %119, %73, %cst_33 {dimension_numbers = #tpu.dot_dimension_numbers<[1], [0], [0], [1], [0, 0, 1, 1], [], []>} : vector<2x32xf32>, vector<32x128xf32>, vector<2x128xf32> -> vector<2x128xf32>
    %122 = arith.addf %120, %121 : vector<2x128xf32>
    %123 = vector.extract_strided_slice %122 {offsets = [0, 0], sizes = [2, 96], strides = [1, 1]} : vector<2x128xf32> to vector<2x96xf32>
    %cst_34 = arith.constant 5.000000e-01 : f32
    %124 = vector.broadcast %cst_34 : f32 to vector<2x96xf32>
    %125 = arith.mulf %124, %123 : vector<2x96xf32>
    %126 = math.tanh %125 : vector<2x96xf32>
    %cst_35 = arith.constant 5.000000e-01 : f32
    %127 = vector.broadcast %cst_35 : f32 to vector<2x96xf32>
    %128 = arith.mulf %127, %126 : vector<2x96xf32>
    %cst_36 = arith.constant 5.000000e-01 : f32
    %129 = vector.broadcast %cst_36 : f32 to vector<2x96xf32>
    %130 = arith.addf %128, %129 : vector<2x96xf32>
    %131 = vector.extract_strided_slice %122 {offsets = [0, 96], sizes = [2, 32], strides = [1, 1]} : vector<2x128xf32> to vector<2x32xf32>
    %132 = math.tanh %131 : vector<2x32xf32>
    %133 = vector.extract_strided_slice %130 {offsets = [0, 32], sizes = [2, 32], strides = [1, 1]} : vector<2x96xf32> to vector<2x32xf32>
    %134 = arith.mulf %133, %116 : vector<2x32xf32>
    %135 = vector.extract_strided_slice %130 {offsets = [0, 0], sizes = [2, 32], strides = [1, 1]} : vector<2x96xf32> to vector<2x32xf32>
    %136 = arith.mulf %135, %132 : vector<2x32xf32>
    %137 = arith.addf %134, %136 : vector<2x32xf32>
    %138 = vector.extract_strided_slice %130 {offsets = [0, 64], sizes = [2, 32], strides = [1, 1]} : vector<2x96xf32> to vector<2x32xf32>
    %139 = math.tanh %137 : vector<2x32xf32>
    %140 = arith.mulf %138, %139 : vector<2x32xf32>
    %141 = vector.extract_strided_slice %82 {offsets = [6, 0], sizes = [2, 128], strides = [1, 1]} : vector<8x128xf32> to vector<2x128xf32>
    %cst_37 = arith.constant dense<0.000000e+00> : vector<2x128xf32>
    %142 = tpu.matmul %140, %73, %cst_37 {dimension_numbers = #tpu.dot_dimension_numbers<[1], [0], [0], [1], [0, 0, 1, 1], [], []>} : vector<2x32xf32>, vector<32x128xf32>, vector<2x128xf32> -> vector<2x128xf32>
    %143 = arith.addf %141, %142 : vector<2x128xf32>
    %144 = vector.extract_strided_slice %143 {offsets = [0, 0], sizes = [2, 96], strides = [1, 1]} : vector<2x128xf32> to vector<2x96xf32>
    %cst_38 = arith.constant 5.000000e-01 : f32
    %145 = vector.broadcast %cst_38 : f32 to vector<2x96xf32>
    %146 = arith.mulf %145, %144 : vector<2x96xf32>
    %147 = math.tanh %146 : vector<2x96xf32>
    %cst_39 = arith.constant 5.000000e-01 : f32
    %148 = vector.broadcast %cst_39 : f32 to vector<2x96xf32>
    %149 = arith.mulf %148, %147 : vector<2x96xf32>
    %cst_40 = arith.constant 5.000000e-01 : f32
    %150 = vector.broadcast %cst_40 : f32 to vector<2x96xf32>
    %151 = arith.addf %149, %150 : vector<2x96xf32>
    %152 = vector.extract_strided_slice %143 {offsets = [0, 96], sizes = [2, 32], strides = [1, 1]} : vector<2x128xf32> to vector<2x32xf32>
    %153 = math.tanh %152 : vector<2x32xf32>
    %154 = vector.extract_strided_slice %151 {offsets = [0, 32], sizes = [2, 32], strides = [1, 1]} : vector<2x96xf32> to vector<2x32xf32>
    %155 = arith.mulf %154, %137 : vector<2x32xf32>
    %156 = vector.extract_strided_slice %151 {offsets = [0, 0], sizes = [2, 32], strides = [1, 1]} : vector<2x96xf32> to vector<2x32xf32>
    %157 = arith.mulf %156, %153 : vector<2x32xf32>
    %158 = arith.addf %155, %157 : vector<2x32xf32>
    %159 = vector.extract_strided_slice %151 {offsets = [0, 64], sizes = [2, 32], strides = [1, 1]} : vector<2x96xf32> to vector<2x32xf32>
    %160 = math.tanh %158 : vector<2x32xf32>
    %161 = arith.mulf %159, %160 : vector<2x32xf32>
    %162 = tpu.concatenate %98, %119, %140, %161 in 0 : vector<2x32xf32>, vector<2x32xf32>, vector<2x32xf32>, vector<2x32xf32> -> vector<8x32xf32>
    %c192 = arith.constant 192 : index
    %c0_41 = arith.constant 0 : index
    %163 = vector.load %arg2[%c192, %c0_41] : memref<232x128xf32, #tpu.memory_space<vmem>>, vector<32x128xf32>
    %c224 = arith.constant 224 : index
    %c0_42 = arith.constant 0 : index
    %164 = vector.load %arg2[%c224, %c0_42] : memref<232x128xf32, #tpu.memory_space<vmem>>, vector<1x128xf32>
    %cst_43 = arith.constant dense<0.000000e+00> : vector<8x128xf32>
    %165 = tpu.matmul %162, %163, %cst_43 {dimension_numbers = #tpu.dot_dimension_numbers<[1], [0], [0], [1], [0, 0, 1, 1], [], []>} : vector<8x32xf32>, vector<32x128xf32>, vector<8x128xf32> -> vector<8x128xf32>
    %166 = vector.broadcast %164 : vector<1x128xf32> to vector<8x128xf32>
    %167 = arith.addf %165, %166 : vector<8x128xf32>
    %c0_44 = arith.constant 0 : index
    %c0_45 = arith.constant 0 : index
    %168 = vector.load %arg3[%c0_44, %c0_45] : memref<8x128xf32, #tpu.memory_space<vmem>>, vector<8x128xf32>
    tpu.vector_store %arg3[%c0_44, %c0_45], %167 {strides = array<i32>} : memref<8x128xf32, #tpu.memory_space<vmem>>, vector<8x128xf32>,
    return
  }
  func.func @transform_0(%arg0: i32) -> (i32, i32) {
    %c0_i32 = arith.constant 0 : i32
    %c0_i32_0 = arith.constant 0 : i32
    %c0_i32_1 = arith.constant 0 : i32
    return %c0_i32, %c0_i32_0 : i32, i32
  }
  func.func @transform_1(%arg0: i32) -> (i32, i32) {
    %c0_i32 = arith.constant 0 : i32
    %c0_i32_0 = arith.constant 0 : i32
    %c0_i32_1 = arith.constant 0 : i32
    return %c0_i32, %c0_i32_0 : i32, i32
  }
  func.func @transform_2(%arg0: i32) -> (i32, i32) {
    %c0_i32 = arith.constant 0 : i32
    %c0_i32_0 = arith.constant 0 : i32
    %c0_i32_1 = arith.constant 0 : i32
    return %c0_i32, %c0_i32_0 : i32, i32
  }
}

</mosaic_0001>

<llo_original>
// kernel: seq2seq_forward.1
$region0: #{seq2seq_forward.1}
  #allocation0 [shape = 'u32[]', space=smem, size = 0x4, offset = 0x4, fixed_abs, tag = 'smem constant byte address 0x4 - core index']
  #allocation1 [shape = 'u32[144,128]{1,0:T(1,128)}', space=vmem, size = 0x12000, scoped, tag = 'internal scratch']
  %s0 = inlined_call_operand.vmem [shape: f32[36,12], index: 0, kind: input, shape index: {}]
  %s1 = inlined_call_operand.vmem [shape: f32[232,128], index: 1, kind: input, shape index: {}]
  %s2 = inlined_call_operand.vmem [shape: f32[8,128], index: 2, kind: output, shape index: {}]
  %s3 = sld [smem:[#allocation0]]
  $region18: #{seq2seq_forward.1} parent=0
    _
  %s5 = ssub.s32 1, %s3
  %s6 = scalar_select 0, %s5, %s3
  // Predicated region
  $region2: #{seq2seq_forward.1} parent=0 // pred_check
    _
  $region3: #{seq2seq_forward.1} parent=0 // pred_check_branch
    %8 = sbr.rel (0) target = $region5
  $region4: #{seq2seq_forward.1} parent=0 // pred_region
    _
  $region5: #{seq2seq_forward.1} parent=0 // pred_fallthru
    _
  // Predicated region
  $region6: #{seq2seq_forward.1} parent=0 // pred_check
    _
  $region7: #{seq2seq_forward.1} parent=0 // pred_check_branch
    %10 = sbr.rel (0) target = $region9
  $region8: #{seq2seq_forward.1} parent=0 // pred_region
    _
  $region9: #{seq2seq_forward.1} parent=0 // pred_fallthru
    _
  %v11 = vld [vmem:[%s1] sm:$0xff]
  %v12 = vld [vmem:[%s1 + $0x8] sm:$0xf]
  %v13 = vld [vmem:[%s1 + $0x20] sm:$0x1]
  %v14 = vld [vmem:[%s1 + $0x21] sm:$0x1]
  %v15 = vld [vmem:[%s1 + $0x22] sm:$0x1]
  %v16 = vld [vmem:[%s1 + $0x23] sm:$0x1]
  %v17 = vld [vmem:[%s0] sm:$0xff]
  %v18 = vld [vmem:[%s0 + $0x8] sm:$0xff]
  %v19 = vld [vmem:[%s0 + $0x10] sm:$0xff]
  %v20 = vld [vmem:[%s0 + $0x18] sm:$0xff]
  %v21 = vld [vmem:[%s0 + $0x20] sm:$0xf]
  %vm22 = vcmask 97280
  %v24 = vsel %vm22, %v17, 0
  %v27 = vsel %vm22, %v18, 0
  %v30 = vsel %vm22, %v19, 0
  %v33 = vsel %vm22, %v20, 0
  %v36 = vsel %vm22, %v21, 0
  %vm38 = vcmask 1043456
  %v40 = vsel %vm38, %v12, 0
  %42 = vmatprep.subr.mxu0 0.0
  %43 = vmatpush1.msra.mxu0 %v11
  %44 = vmatprep.subr.mxu0 0.0
  %45 = vmatpush1.msra.mxu0 %v40
  %46 = vmatprep.subr.mxu0 0.0
  %47 = vmatpush1.msra.mxu0 0.0
  %48 = vmatprep.subr.mxu0 0.0
  %49 = vmatpush1.msra.mxu0 0.0
  %50 = vmatprep.subr.mxu0 0.0
  %51 = vmatpush1.msra.mxu0 0.0
  %52 = vmatprep.subr.mxu0 0.0
  %53 = vmatpush1.msra.mxu0 0.0
  %54 = vmatprep.subr.mxu0 0.0
  %55 = vmatpush1.msra.mxu0 0.0
  %56 = vmatprep.subr.mxu0 0.0
  %57 = vmatpush1.msra.mxu0 0.0
  %58 = vmatprep.subr.mxu0 0.0
  %59 = vmatpush1.msra.mxu0 0.0
  %60 = vmatprep.subr.mxu0 0.0
  %61 = vmatpush1.msra.mxu0 0.0
  %62 = vmatprep.subr.mxu0 0.0
  %63 = vmatpush1.msra.mxu0 0.0
  %64 = vmatprep.subr.mxu0 0.0
  %65 = vmatpush1.msra.mxu0 0.0
  %66 = vmatprep.subr.mxu0 0.0
  %67 = vmatpush1.msra.mxu0 0.0
  %68 = vmatprep.subr.mxu0 0.0
  %69 = vmatpush1.msra.mxu0 0.0
  %70 = vmatprep.subr.mxu0 0.0
  %71 = vmatpush1.msra.mxu0 0.0
  %72 = vmatprep.subr.mxu0 0.0
  %73 = vmatpush1.msra.mxu0 0.0
  %74 = vmatprep.subr.mxu0 0.0
  %75 = vmatpush1.msra.mxu0 0.0
  %76 = vmatprep.subr.mxu0 0.0
  %77 = vmatpush1.msra.mxu0 0.0
  %78 = vmatprep.subr.mxu0 0.0
  %79 = vmatpush1.msra.mxu0 0.0
  %80 = vmatprep.subr.mxu0 0.0
  %81 = vmatpush1.msra.mxu0 0.0
  %82 = vmatprep.subr.mxu0 0.0
  %83 = vmatpush1.msra.mxu0 0.0
  %84 = vmatprep.subr.mxu0 0.0
  %85 = vmatpush1.msra.mxu0 0.0
  %86 = vmatprep.subr.mxu0 0.0
  %87 = vmatpush1.msra.mxu0 0.0
  %88 = vmatprep.subr.mxu0 0.0
  %89 = vmatpush1.msra.mxu0 0.0
  %90 = vmatprep.subr.mxu0 0.0
  %91 = vmatpush1.msra.mxu0 0.0
  %92 = vmatprep.subr.mxu0 0.0
  %93 = vmatpush1.msra.mxu0 0.0
  %94 = vmatprep.subr.mxu0 0.0
  %95 = vmatpush1.msra.mxu0 0.0
  %96 = vmatprep.subr.mxu0 0.0
  %97 = vmatpush1.msra.mxu0 0.0
  %98 = vmatprep.subr.mxu0 0.0
  %99 = vmatpush1.msra.mxu0 0.0
  %100 = vmatprep.subr.mxu0 0.0
  %101 = vmatpush1.msra.mxu0 0.0
  %102 = vmatprep.subr.mxu0 0.0
  %103 = vmatpush1.msra.mxu0 0.0
  %104 = vmatprep.subr.mxu0 0.0
  %105 = vmatpush1.msra.mxu0 0.0
  %106 = vmatprep.mubr.f32.mxu0 0.0
  %107 = vmatmul.mubr.f32.gmra.mrb[0].mxu0 %v24
  %v108 = vpop.f32.mrb[0].mxu0
  %v109 = vadd.f32 0.0, %v108
  %v110 = vpop.f32.mrb[0].mxu0
  %111 = vmatprep.mubr.f32.mxu0 0.0
  %112 = vmatmul.mubr.f32.gmra.mrb[0].mxu0 %v27
  %v113 = vpop.f32.mrb[0].mxu0
  %v114 = vadd.f32 0.0, %v113
  %v115 = vpop.f32.mrb[0].mxu0
  %116 = vmatprep.mubr.f32.mxu0 0.0
  %117 = vmatmul.mubr.f32.gmra.mrb[0].mxu0 %v30
  %v118 = vpop.f32.mrb[0].mxu0
  %v119 = vadd.f32 0.0, %v118
  %v120 = vpop.f32.mrb[0].mxu0
  %121 = vmatprep.mubr.f32.mxu0 0.0
  %122 = vmatmul.mubr.f32.gmra.mrb[0].mxu0 %v33
  %v123 = vpop.f32.mrb[0].mxu0
  %v124 = vadd.f32 0.0, %v123
  %v125 = vpop.f32.mrb[0].mxu0
  %126 = vmatprep.mubr.f32.mxu0 0.0
  %127 = vmatmul.mubr.f32.gmra.mrb[0].mxu0 %v36
  %v128 = vpop.f32.mrb[0].mxu0
  %v129 = vadd.f32 0.0, %v128
  %v130 = vpop.f32.mrb[0].mxu0
  %131 = vdwg.mxu0
  %v132 = vlaneseq
  %v133 = vshrl.u32 %v132, 7
  %v134 = vsub.s32 0, %v133
  %v135 = vrot.slane %v13, %v134
  %v136 = vmul.f32 %v109, %v135
  %v137 = vmul.f32 %v114, %v135
  %v138 = vmul.f32 %v119, %v135
  %v139 = vmul.f32 %v124, %v135
  %v140 = vmul.f32 %v129, %v135
  %v141 = vlaneseq
  %v142 = vshrl.u32 %v141, 7
  %v143 = vsub.s32 0, %v142
  %v144 = vrot.slane %v14, %v143
  %v145 = vadd.f32 %v136, %v144
  %v146 = vadd.f32 %v137, %v144
  %v147 = vadd.f32 %v138, %v144
  %v148 = vadd.f32 %v139, %v144
  %v149 = vadd.f32 %v140, %v144
  %v150 = vmax.f32 %v145, 0.0
  %v151 = vmax.f32 %v146, 0.0
  %v152 = vmax.f32 %v147, 0.0
  %v153 = vmax.f32 %v148, 0.0
  %v154 = vmax.f32 %v149, 0.0
  %v160 = vcombine.high %v150, %v150
  %v162 = vunpack.c.l.s4 1983009808
  %v163 = vunpack.c.0.s8 %v162
  %v164 = vlaneseq
  %v165 = vshrl.u32 %v164, 7
  %v166 = vsub.s32 %v163, %v165
  %v167 = vrot.slane %v150, %v166
  %v169 = vunpack.c.l.s4 1983009808
  %v170 = vunpack.c.0.s8 %v169
  %v171 = vlaneseq
  %v172 = vshrl.u32 %v171, 7
  %v173 = vsub.s32 %v170, %v172
  %v174 = vrot.slane %v160, %v173
  %v175 = vcombine.high %v167, %v167
  %v176 = vcombine.high %v174, %v174
  %v177 = vcombine.high %v151, %v151
  %v179 = vunpack.c.l.s4 1983009808
  %v180 = vunpack.c.0.s8 %v179
  %v181 = vlaneseq
  %v182 = vshrl.u32 %v181, 7
  %v183 = vsub.s32 %v180, %v182
  %v184 = vrot.slane %v151, %v183
  %v186 = vunpack.c.l.s4 1983009808
  %v187 = vunpack.c.0.s8 %v186
  %v188 = vlaneseq
  %v189 = vshrl.u32 %v188, 7
  %v190 = vsub.s32 %v187, %v189
  %v191 = vrot.slane %v177, %v190
  %v192 = vcombine.high %v184, %v184
  %v193 = vcombine.high %v191, %v191
  %v194 = vcombine.high %v152, %v152
  %v196 = vunpack.c.l.s4 1983009808
  %v197 = vunpack.c.0.s8 %v196
  %v198 = vlaneseq
  %v199 = vshrl.u32 %v198, 7
  %v200 = vsub.s32 %v197, %v199
  %v201 = vrot.slane %v152, %v200
  %v203 = vunpack.c.l.s4 1983009808
  %v204 = vunpack.c.0.s8 %v203
  %v205 = vlaneseq
  %v206 = vshrl.u32 %v205, 7
  %v207 = vsub.s32 %v204, %v206
  %v208 = vrot.slane %v194, %v207
  %v209 = vcombine.high %v201, %v201
  %v210 = vcombine.high %v208, %v208
  %v211 = vcombine.high %v153, %v153
  %v213 = vunpack.c.l.s4 1983009808
  %v214 = vunpack.c.0.s8 %v213
  %v215 = vlaneseq
  %v216 = vshrl.u32 %v215, 7
  %v217 = vsub.s32 %v214, %v216
  %v218 = vrot.slane %v153, %v217
  %v220 = vunpack.c.l.s4 1983009808
  %v221 = vunpack.c.0.s8 %v220
  %v222 = vlaneseq
  %v223 = vshrl.u32 %v222, 7
  %v224 = vsub.s32 %v221, %v223
  %v225 = vrot.slane %v211, %v224
  %v226 = vcombine.high %v218, %v218
  %v227 = vcombine.high %v225, %v225
  %v229 = vunpack.c.l.s4 1983009808
  %v230 = vunpack.c.0.s8 %v229
  %v231 = vlaneseq
  %v232 = vshrl.u32 %v231, 7
  %v233 = vsub.s32 %v230, %v232
  %v234 = vrot.slane %v154, %v233
  %v235 = vcombine.high %v234, %v234
  %vm254 = vcmask 58368
  %v255 = vsel %vm254, %v167, -inf
  %v256 = vrot.slane %v255, 4
  %v257 = vmax.f32 %v255, %v256
  %v258 = vrot.slane %v257, 2
  %v259 = vmax.f32 %v257, %v258
  %v260 = vrot.slane %v259, 1
  %v261 = vmax.f32 %v259, %v260
  %v262 = vsel %vm254, %v175, -inf
  %v263 = vrot.slane %v262, 4
  %v264 = vmax.f32 %v262, %v263
  %v265 = vrot.slane %v264, 2
  %v266 = vmax.f32 %v264, %v265
  %v267 = vrot.slane %v266, 1
  %v268 = vmax.f32 %v266, %v267
  %v269 = vsel %vm254, %v174, -inf
  %v270 = vrot.slane %v269, 4
  %v271 = vmax.f32 %v269, %v270
  %v272 = vrot.slane %v271, 2
  %v273 = vmax.f32 %v271, %v272
  %v274 = vrot.slane %v273, 1
  %v275 = vmax.f32 %v273, %v274
  %v276 = vsel %vm254, %v176, -inf
  %v277 = vrot.slane %v276, 4
  %v278 = vmax.f32 %v276, %v277
  %v279 = vrot.slane %v278, 2
  %v280 = vmax.f32 %v278, %v279
  %v281 = vrot.slane %v280, 1
  %v282 = vmax.f32 %v280, %v281
  %v283 = vsel %vm254, %v184, -inf
  %v284 = vrot.slane %v283, 4
  %v285 = vmax.f32 %v283, %v284
  %v286 = vrot.slane %v285, 2
  %v287 = vmax.f32 %v285, %v286
  %v288 = vrot.slane %v287, 1
  %v289 = vmax.f32 %v287, %v288
  %v290 = vsel %vm254, %v192, -inf
  %v291 = vrot.slane %v290, 4
  %v292 = vmax.f32 %v290, %v291
  %v293 = vrot.slane %v292, 2
  %v294 = vmax.f32 %v292, %v293
  %v295 = vrot.slane %v294, 1
  %v296 = vmax.f32 %v294, %v295
  %v297 = vsel %vm254, %v191, -inf
  %v298 = vrot.slane %v297, 4
  %v299 = vmax.f32 %v297, %v298
  %v300 = vrot.slane %v299, 2
  %v301 = vmax.f32 %v299, %v300
  %v302 = vrot.slane %v301, 1
  %v303 = vmax.f32 %v301, %v302
  %v304 = vsel %vm254, %v193, -inf
  %v305 = vrot.slane %v304, 4
  %v306 = vmax.f32 %v304, %v305
  %v307 = vrot.slane %v306, 2
  %v308 = vmax.f32 %v306, %v307
  %v309 = vrot.slane %v308, 1
  %v310 = vmax.f32 %v308, %v309
  %v311 = vsel %vm254, %v201, -inf
  %v312 = vrot.slane %v311, 4
  %v313 = vmax.f32 %v311, %v312
  %v314 = vrot.slane %v313, 2
  %v315 = vmax.f32 %v313, %v314
  %v316 = vrot.slane %v315, 1
  %v317 = vmax.f32 %v315, %v316
  %v318 = vsel %vm254, %v209, -inf
  %v319 = vrot.slane %v318, 4
  %v320 = vmax.f32 %v318, %v319
  %v321 = vrot.slane %v320, 2
  %v322 = vmax.f32 %v320, %v321
  %v323 = vrot.slane %v322, 1
  %v324 = vmax.f32 %v322, %v323
  %v325 = vsel %vm254, %v208, -inf
  %v326 = vrot.slane %v325, 4
  %v327 = vmax.f32 %v325, %v326
  %v328 = vrot.slane %v327, 2
  %v329 = vmax.f32 %v327, %v328
  %v330 = vrot.slane %v329, 1
  %v331 = vmax.f32 %v329, %v330
  %v332 = vsel %vm254, %v210, -inf
  %v333 = vrot.slane %v332, 4
  %v334 = vmax.f32 %v332, %v333
  %v335 = vrot.slane %v334, 2
  %v336 = vmax.f32 %v334, %v335
  %v337 = vrot.slane %v336, 1
  %v338 = vmax.f32 %v336, %v337
  %v339 = vsel %vm254, %v218, -inf
  %v340 = vrot.slane %v339, 4
  %v341 = vmax.f32 %v339, %v340
  %v342 = vrot.slane %v341, 2
  %v343 = vmax.f32 %v341, %v342
  %v344 = vrot.slane %v343, 1
  %v345 = vmax.f32 %v343, %v344
  %v346 = vsel %vm254, %v226, -inf
  %v347 = vrot.slane %v346, 4
  %v348 = vmax.f32 %v346, %v347
  %v349 = vrot.slane %v348, 2
  %v350 = vmax.f32 %v348, %v349
  %v351 = vrot.slane %v350, 1
  %v352 = vmax.f32 %v350, %v351
  %v353 = vsel %vm254, %v225, -inf
  %v354 = vrot.slane %v353, 4
  %v355 = vmax.f32 %v353, %v354
  %v356 = vrot.slane %v355, 2
  %v357 = vmax.f32 %v355, %v356
  %v358 = vrot.slane %v357, 1
  %v359 = vmax.f32 %v357, %v358
  %v360 = vsel %vm254, %v227, -inf
  %v361 = vrot.slane %v360, 4
  %v362 = vmax.f32 %v360, %v361
  %v363 = vrot.slane %v362, 2
  %v364 = vmax.f32 %v362, %v363
  %v365 = vrot.slane %v364, 1
  %v366 = vmax.f32 %v364, %v365
  %v367 = vsel %vm254, %v234, -inf
  %v368 = vrot.slane %v367, 4
  %v369 = vmax.f32 %v367, %v368
  %v370 = vrot.slane %v369, 2
  %v371 = vmax.f32 %v369, %v370
  %v372 = vrot.slane %v371, 1
  %v373 = vmax.f32 %v371, %v372
  %v374 = vsel %vm254, %v235, -inf
  %v375 = vrot.slane %v374, 4
  %v376 = vmax.f32 %v374, %v375
  %v377 = vrot.slane %v376, 2
  %v378 = vmax.f32 %v376, %v377
  %v379 = vrot.slane %v378, 1
  %v380 = vmax.f32 %v378, %v379
  %vm389 = vcmask 1041409
  %v390 = vsel %vm389, %v268, %v261
  %vm391 = vcmask 1042434
  %v392 = vsel %vm391, %v275, %v390
  %vm393 = vcmask 1043459
  %v394 = vsel %vm393, %v282, %v392
  %vm395 = vcmask 1044484
  %v396 = vsel %vm395, %v289, %v394
  %vm397 = vcmask 1045509
  %v398 = vsel %vm397, %v296, %v396
  %vm399 = vcmask 1046534
  %v400 = vsel %vm399, %v303, %v398
  %vm401 = vcmask 1047559
  %v402 = vsel %vm401, %v310, %v400
  %v405 = vsel %vm389, %v275, %v268
  %v406 = vsel %vm391, %v282, %v405
  %v407 = vsel %vm393, %v289, %v406
  %v408 = vsel %vm395, %v296, %v407
  %v409 = vsel %vm397, %v303, %v408
  %v410 = vsel %vm399, %v310, %v409
  %v411 = vsel %vm401, %v317, %v410
  %412 = vrot.lane.b32.xlu0 %v411, 8
  %v413 = vpop.permute.xlu0 %412
  %vm415 = vcmask 64512
  %v416 = vsel %vm415, %v402, %v413
  %v425 = vsel %vm389, %v331, %v324
  %v426 = vsel %vm391, %v338, %v425
  %v427 = vsel %vm393, %v345, %v426
  %v428 = vsel %vm395, %v352, %v427
  %v429 = vsel %vm397, %v359, %v428
  %v430 = vsel %vm399, %v366, %v429
  %v431 = vsel %vm401, %v373, %v430
  %v434 = vsel %vm389, %v338, %v331
  %v435 = vsel %vm391, %v345, %v434
  %v436 = vsel %vm393, %v352, %v435
  %v437 = vsel %vm395, %v359, %v436
  %v438 = vsel %vm397, %v366, %v437
  %v439 = vsel %vm399, %v373, %v438
  %v440 = vsel %vm401, %v380, %v439
  %441 = vrot.lane.b32.xlu0 %v440, 8
  %v442 = vpop.permute.xlu0 %441
  %v444 = vsel %vm415, %v431, %v442
  %v445 = vld [vmem:[%s1 + $0x10] sm:$0xff]
  %v446 = vld [vmem:[%s1 + $0x18] sm:$0xff]
  %vm447 = vcmask 130048
  %v449 = vsel %vm447, %v416, 0
  %v452 = vsel %vm447, %v444, 0
  %454 = vmatprep.subr.mxu0 0.0
  %455 = vmatpush1.msra.mxu0 %v445
  %456 = vmatprep.subr.mxu0 0.0
  %457 = vmatpush1.msra.mxu0 %v446
  %458 = vmatprep.subr.mxu0 0.0
  %459 = vmatpush1.msra.mxu0 0.0
  %460 = vmatprep.subr.mxu0 0.0
  %461 = vmatpush1.msra.mxu0 0.0
  %462 = vmatprep.subr.mxu0 0.0
  %463 = vmatpush1.msra.mxu0 0.0
  %464 = vmatprep.subr.mxu0 0.0
  %465 = vmatpush1.msra.mxu0 0.0
  %466 = vmatprep.subr.mxu0 0.0
  %467 = vmatpush1.msra.mxu0 0.0
  %468 = vmatprep.subr.mxu0 0.0
  %469 = vmatpush1.msra.mxu0 0.0
  %470 = vmatprep.subr.mxu0 0.0
  %471 = vmatpush1.msra.mxu0 0.0
  %472 = vmatprep.subr.mxu0 0.0
  %473 = vmatpush1.msra.mxu0 0.0
  %474 = vmatprep.subr.mxu0 0.0
  %475 = vmatpush1.msra.mxu0 0.0
  %476 = vmatprep.subr.mxu0 0.0
  %477 = vmatpush1.msra.mxu0 0.0
  %478 = vmatprep.subr.mxu0 0.0
  %479 = vmatpush1.msra.mxu0 0.0
  %480 = vmatprep.subr.mxu0 0.0
  %481 = vmatpush1.msra.mxu0 0.0
  %482 = vmatprep.subr.mxu0 0.0
  %483 = vmatpush1.msra.mxu0 0.0
  %484 = vmatprep.subr.mxu0 0.0
  %485 = vmatpush1.msra.mxu0 0.0
  %486 = vmatprep.subr.mxu0 0.0
  %487 = vmatpush1.msra.mxu0 0.0
  %488 = vmatprep.subr.mxu0 0.0
  %489 = vmatpush1.msra.mxu0 0.0
  %490 = vmatprep.subr.mxu0 0.0
  %491 = vmatpush1.msra.mxu0 0.0
  %492 = vmatprep.subr.mxu0 0.0
  %493 = vmatpush1.msra.mxu0 0.0
  %494 = vmatprep.subr.mxu0 0.0
  %495 = vmatpush1.msra.mxu0 0.0
  %496 = vmatprep.subr.mxu0 0.0
  %497 = vmatpush1.msra.mxu0 0.0
  %498 = vmatprep.subr.mxu0 0.0
  %499 = vmatpush1.msra.mxu0 0.0
  %500 = vmatprep.subr.mxu0 0.0
  %501 = vmatpush1.msra.mxu0 0.0
  %502 = vmatprep.subr.mxu0 0.0
  %503 = vmatpush1.msra.mxu0 0.0
  %504 = vmatprep.subr.mxu0 0.0
  %505 = vmatpush1.msra.mxu0 0.0
  %506 = vmatprep.subr.mxu0 0.0
  %507 = vmatpush1.msra.mxu0 0.0
  %508 = vmatprep.subr.mxu0 0.0
  %509 = vmatpush1.msra.mxu0 0.0
  %510 = vmatprep.subr.mxu0 0.0
  %511 = vmatpush1.msra.mxu0 0.0
  %512 = vmatprep.subr.mxu0 0.0
  %513 = vmatpush1.msra.mxu0 0.0
  %514 = vmatprep.subr.mxu0 0.0
  %515 = vmatpush1.msra.mxu0 0.0
  %516 = vmatprep.subr.mxu0 0.0
  %517 = vmatpush1.msra.mxu0 0.0
  %518 = vmatprep.mubr.f32.mxu0 0.0
  %519 = vmatmul.mubr.f32.gmra.mrb[0].mxu0 %v449
  %v520 = vpop.f32.mrb[0].mxu0
  %v521 = vadd.f32 0.0, %v520
  %v522 = vpop.f32.mrb[0].mxu0
  %523 = vmatprep.mubr.f32.mxu0 0.0
  %524 = vmatmul.mubr.f32.gmra.mrb[0].mxu0 %v452
  %v525 = vpop.f32.mrb[0].mxu0
  %v526 = vadd.f32 0.0, %v525
  %v527 = vpop.f32.mrb[0].mxu0
  %528 = vdwg.mxu0
  %v529 = vlaneseq
  %v530 = vshrl.u32 %v529, 7
  %v531 = vsub.s32 0, %v530
  %v532 = vrot.slane %v15, %v531
  %v533 = vmul.f32 %v521, %v532
  %v534 = vmul.f32 %v526, %v532
  %v535 = vlaneseq
  %v536 = vshrl.u32 %v535, 7
  %v537 = vsub.s32 0, %v536
  %v538 = vrot.slane %v16, %v537
  %v539 = vadd.f32 %v533, %v538
  %v540 = vadd.f32 %v534, %v538
  %v541 = vmax.f32 %v539, 0.0
  %v542 = vmax.f32 %v540, 0.0
  %v545 = vcombine.high %v541, %v541
  %v547 = vunpack.c.l.s4 1983009808
  %v548 = vunpack.c.0.s8 %v547
  %v549 = vlaneseq
  %v550 = vshrl.u32 %v549, 7
  %v551 = vsub.s32 %v548, %v550
  %v552 = vrot.slane %v541, %v551
  %v554 = vunpack.c.l.s4 1983009808
  %v555 = vunpack.c.0.s8 %v554
  %v556 = vlaneseq
  %v557 = vshrl.u32 %v556, 7
  %v558 = vsub.s32 %v555, %v557
  %v559 = vrot.slane %v545, %v558
  %v560 = vcombine.high %v552, %v552
  %v561 = vcombine.high %v559, %v559
  %v562 = vcombine.high %v542, %v542
  %v564 = vunpack.c.l.s4 1983009808
  %v565 = vunpack.c.0.s8 %v564
  %v566 = vlaneseq
  %v567 = vshrl.u32 %v566, 7
  %v568 = vsub.s32 %v565, %v567
  %v569 = vrot.slane %v542, %v568
  %v571 = vunpack.c.l.s4 1983009808
  %v572 = vunpack.c.0.s8 %v571
  %v573 = vlaneseq
  %v574 = vshrl.u32 %v573, 7
  %v575 = vsub.s32 %v572, %v574
  %v576 = vrot.slane %v562, %v575
  %v577 = vcombine.high %v569, %v569
  %v578 = vcombine.high %v576, %v576
  %v587 = vsel %vm254, %v552, -inf
  %v588 = vrot.slane %v587, 4
  %v589 = vmax.f32 %v587, %v588
  %v590 = vrot.slane %v589, 2
  %v591 = vmax.f32 %v589, %v590
  %v592 = vrot.slane %v591, 1
  %v593 = vmax.f32 %v591, %v592
  %v594 = vsel %vm254, %v560, -inf
  %v595 = vrot.slane %v594, 4
  %v596 = vmax.f32 %v594, %v595
  %v597 = vrot.slane %v596, 2
  %v598 = vmax.f32 %v596, %v597
  %v599 = vrot.slane %v598, 1
  %v600 = vmax.f32 %v598, %v599
  %v601 = vsel %vm254, %v559, -inf
  %v602 = vrot.slane %v601, 4
  %v603 = vmax.f32 %v601, %v602
  %v604 = vrot.slane %v603, 2
  %v605 = vmax.f32 %v603, %v604
  %v606 = vrot.slane %v605, 1
  %v607 = vmax.f32 %v605, %v606
  %v608 = vsel %vm254, %v561, -inf
  %v609 = vrot.slane %v608, 4
  %v610 = vmax.f32 %v608, %v609
  %v611 = vrot.slane %v610, 2
  %v612 = vmax.f32 %v610, %v611
  %v613 = vrot.slane %v612, 1
  %v614 = vmax.f32 %v612, %v613
  %v615 = vsel %vm254, %v569, -inf
  %v616 = vrot.slane %v615, 4
  %v617 = vmax.f32 %v615, %v616
  %v618 = vrot.slane %v617, 2
  %v619 = vmax.f32 %v617, %v618
  %v620 = vrot.slane %v619, 1
  %v621 = vmax.f32 %v619, %v620
  %v622 = vsel %vm254, %v577, -inf
  %v623 = vrot.slane %v622, 4
  %v624 = vmax.f32 %v622, %v623
  %v625 = vrot.slane %v624, 2
  %v626 = vmax.f32 %v624, %v625
  %v627 = vrot.slane %v626, 1
  %v628 = vmax.f32 %v626, %v627
  %v629 = vsel %vm254, %v576, -inf
  %v630 = vrot.slane %v629, 4
  %v631 = vmax.f32 %v629, %v630
  %v632 = vrot.slane %v631, 2
  %v633 = vmax.f32 %v631, %v632
  %v634 = vrot.slane %v633, 1
  %v635 = vmax.f32 %v633, %v634
  %v636 = vsel %vm254, %v578, -inf
  %v637 = vrot.slane %v636, 4
  %v638 = vmax.f32 %v636, %v637
  %v639 = vrot.slane %v638, 2
  %v640 = vmax.f32 %v638, %v639
  %v641 = vrot.slane %v640, 1
  %v642 = vmax.f32 %v640, %v641
  %644 = vrot.lane.b32.xlu0 %v600, 8
  %v645 = vpop.permute.xlu0 %644
  %648 = vrot.lane.b32.xlu0 %v607, 16
  %v649 = vpop.permute.xlu0 %648
  %652 = vrot.lane.b32.xlu0 %v614, 24
  %v653 = vpop.permute.xlu0 %652
  %v655 = vsel %vm415, %v593, %v645
  %v656 = vsel %vm447, %v655, %v649
  %vm657 = vcmask 195584
  %v658 = vsel %vm657, %v656, %v653
  %660 = vrot.lane.b32.xlu0 %v628, 8
  %v661 = vpop.permute.xlu0 %660
  %664 = vrot.lane.b32.xlu0 %v635, 16
  %v665 = vpop.permute.xlu0 %664
  %668 = vrot.lane.b32.xlu0 %v642, 24
  %v669 = vpop.permute.xlu0 %668
  %v671 = vsel %vm415, %v621, %v661
  %v672 = vsel %vm447, %v671, %v665
  %v673 = vsel %vm657, %v672, %v669
  %v675 = vrot.slane %v673, 7
  %vm677 = vcmask 1040384
  %v678 = vsel %vm677, %v658, %v675
  %v679 = vld [vmem:[%s1 + $0x28] sm:$0xff]
  %v680 = vld [vmem:[%s1 + $0x30] sm:$0xff]
  %v681 = vld [vmem:[%s1 + $0x38] sm:$0xff]
  %v682 = vld [vmem:[%s1 + $0x40] sm:$0xff]
  %v683 = vld [vmem:[%s1 + $0x48] sm:$0x1]
  %v684 = vlaneseq
  %v685 = vshrl.u32 %v684, 7
  %v686 = vsub.s32 0, %v685
  %v687 = vrot.slane %v683, %v686
  %vm688 = vcmask 261120
  %v690 = vsel %vm688, %v678, 0
  %692 = vmatprep.subr.mxu0 0.0
  %693 = vmatpush1.msra.mxu0 %v679
  %694 = vmatprep.subr.mxu0 0.0
  %695 = vmatpush1.msra.mxu0 %v680
  %696 = vmatprep.subr.mxu0 0.0
  %697 = vmatpush1.msra.mxu0 %v681
  %698 = vmatprep.subr.mxu0 0.0
  %699 = vmatpush1.msra.mxu0 %v682
  %700 = vmatprep.subr.mxu0 0.0
  %701 = vmatpush1.msra.mxu0 0.0
  %702 = vmatprep.subr.mxu0 0.0
  %703 = vmatpush1.msra.mxu0 0.0
  %704 = vmatprep.subr.mxu0 0.0
  %705 = vmatpush1.msra.mxu0 0.0
  %706 = vmatprep.subr.mxu0 0.0
  %707 = vmatpush1.msra.mxu0 0.0
  %708 = vmatprep.subr.mxu0 0.0
  %709 = vmatpush1.msra.mxu0 0.0
  %710 = vmatprep.subr.mxu0 0.0
  %711 = vmatpush1.msra.mxu0 0.0
  %712 = vmatprep.subr.mxu0 0.0
  %713 = vmatpush1.msra.mxu0 0.0
  %714 = vmatprep.subr.mxu0 0.0
  %715 = vmatpush1.msra.mxu0 0.0
  %716 = vmatprep.subr.mxu0 0.0
  %717 = vmatpush1.msra.mxu0 0.0
  %718 = vmatprep.subr.mxu0 0.0
  %719 = vmatpush1.msra.mxu0 0.0
  %720 = vmatprep.subr.mxu0 0.0
  %721 = vmatpush1.msra.mxu0 0.0
  %722 = vmatprep.subr.mxu0 0.0
  %723 = vmatpush1.msra.mxu0 0.0
  %724 = vmatprep.subr.mxu0 0.0
  %725 = vmatpush1.msra.mxu0 0.0
  %726 = vmatprep.subr.mxu0 0.0
  %727 = vmatpush1.msra.mxu0 0.0
  %728 = vmatprep.subr.mxu0 0.0
  %729 = vmatpush1.msra.mxu0 0.0
  %730 = vmatprep.subr.mxu0 0.0
  %731 = vmatpush1.msra.mxu0 0.0
  %732 = vmatprep.subr.mxu0 0.0
  %733 = vmatpush1.msra.mxu0 0.0
  %734 = vmatprep.subr.mxu0 0.0
  %735 = vmatpush1.msra.mxu0 0.0
  %736 = vmatprep.subr.mxu0 0.0
  %737 = vmatpush1.msra.mxu0 0.0
  %738 = vmatprep.subr.mxu0 0.0
  %739 = vmatpush1.msra.mxu0 0.0
  %740 = vmatprep.subr.mxu0 0.0
  %741 = vmatpush1.msra.mxu0 0.0
  %742 = vmatprep.subr.mxu0 0.0
  %743 = vmatpush1.msra.mxu0 0.0
  %744 = vmatprep.subr.mxu0 0.0
  %745 = vmatpush1.msra.mxu0 0.0
  %746 = vmatprep.subr.mxu0 0.0
  %747 = vmatpush1.msra.mxu0 0.0
  %748 = vmatprep.subr.mxu0 0.0
  %749 = vmatpush1.msra.mxu0 0.0
  %750 = vmatprep.subr.mxu0 0.0
  %751 = vmatpush1.msra.mxu0 0.0
  %752 = vmatprep.subr.mxu0 0.0
  %753 = vmatpush1.msra.mxu0 0.0
  %754 = vmatprep.subr.mxu0 0.0
  %755 = vmatpush1.msra.mxu0 0.0
  %756 = vmatprep.mubr.f32.mxu0 0.0
  %757 = vmatmul.mubr.f32.gmra.mrb[0].mxu0 %v690
  %v758 = vpop.f32.mrb[0].mxu0
  %v759 = vadd.f32 %v687, %v758
  %v760 = vpop.f32.mrb[0].mxu0
  %761 = vdwg.mxu0
  %v762 = vmul.f32 %v759, 0.5
  %v763 = vtanh.pop %v762
  %v764 = vmul.f32 %v763, 0.5
  %v765 = vadd.f32 %v764, 0.5
  %v766 = vtanh.pop %v759
  %768 = vrot.lane.b32.xlu0 %v766, 64
  %v769 = vpop.permute.xlu0 %768
  %v771 = vmul.f32 %v765, %v769
  %v772 = vtanh.pop %v771
  %774 = vrot.lane.b32.xlu0 %v772, 32
  %v775 = vpop.permute.xlu0 %774
  %v777 = vmul.f32 %v765, %v775
  %v778 = vld [vmem:[%s1 + $0x50] sm:$0xff]
  %v779 = vld [vmem:[%s1 + $0x58] sm:$0xff]
  %v780 = vld [vmem:[%s1 + $0x60] sm:$0xff]
  %v781 = vld [vmem:[%s1 + $0x68] sm:$0xff]
  %v782 = vld [vmem:[%s1 + $0x70] sm:$0x1]
  %v783 = vlaneseq
  %v784 = vshrl.u32 %v783, 7
  %v785 = vsub.s32 0, %v784
  %v786 = vrot.slane %v782, %v785
  %788 = vrot.lane.b32.xlu0 %v777, 96
  %v789 = vpop.permute.xlu0 %788
  %v790 = vsel %vm688, %v789, 0
  %792 = vmatprep.subr.mxu0 0.0
  %793 = vmatpush1.msra.mxu0 %v778
  %794 = vmatprep.subr.mxu0 0.0
  %795 = vmatpush1.msra.mxu0 %v779
  %796 = vmatprep.subr.mxu0 0.0
  %797 = vmatpush1.msra.mxu0 %v780
  %798 = vmatprep.subr.mxu0 0.0
  %799 = vmatpush1.msra.mxu0 %v781
  %800 = vmatprep.subr.mxu0 0.0
  %801 = vmatpush1.msra.mxu0 0.0
  %802 = vmatprep.subr.mxu0 0.0
  %803 = vmatpush1.msra.mxu0 0.0
  %804 = vmatprep.subr.mxu0 0.0
  %805 = vmatpush1.msra.mxu0 0.0
  %806 = vmatprep.subr.mxu0 0.0
  %807 = vmatpush1.msra.mxu0 0.0
  %808 = vmatprep.subr.mxu0 0.0
  %809 = vmatpush1.msra.mxu0 0.0
  %810 = vmatprep.subr.mxu0 0.0
  %811 = vmatpush1.msra.mxu0 0.0
  %812 = vmatprep.subr.mxu0 0.0
  %813 = vmatpush1.msra.mxu0 0.0
  %814 = vmatprep.subr.mxu0 0.0
  %815 = vmatpush1.msra.mxu0 0.0
  %816 = vmatprep.subr.mxu0 0.0
  %817 = vmatpush1.msra.mxu0 0.0
  %818 = vmatprep.subr.mxu0 0.0
  %819 = vmatpush1.msra.mxu0 0.0
  %820 = vmatprep.subr.mxu0 0.0
  %821 = vmatpush1.msra.mxu0 0.0
  %822 = vmatprep.subr.mxu0 0.0
  %823 = vmatpush1.msra.mxu0 0.0
  %824 = vmatprep.subr.mxu0 0.0
  %825 = vmatpush1.msra.mxu0 0.0
  %826 = vmatprep.subr.mxu0 0.0
  %827 = vmatpush1.msra.mxu0 0.0
  %828 = vmatprep.subr.mxu0 0.0
  %829 = vmatpush1.msra.mxu0 0.0
  %830 = vmatprep.subr.mxu0 0.0
  %831 = vmatpush1.msra.mxu0 0.0
  %832 = vmatprep.subr.mxu0 0.0
  %833 = vmatpush1.msra.mxu0 0.0
  %834 = vmatprep.subr.mxu0 0.0
  %835 = vmatpush1.msra.mxu0 0.0
  %836 = vmatprep.subr.mxu0 0.0
  %837 = vmatpush1.msra.mxu0 0.0
  %838 = vmatprep.subr.mxu0 0.0
  %839 = vmatpush1.msra.mxu0 0.0
  %840 = vmatprep.subr.mxu0 0.0
  %841 = vmatpush1.msra.mxu0 0.0
  %842 = vmatprep.subr.mxu0 0.0
  %843 = vmatpush1.msra.mxu0 0.0
  %844 = vmatprep.subr.mxu0 0.0
  %845 = vmatpush1.msra.mxu0 0.0
  %846 = vmatprep.subr.mxu0 0.0
  %847 = vmatpush1.msra.mxu0 0.0
  %848 = vmatprep.subr.mxu0 0.0
  %849 = vmatpush1.msra.mxu0 0.0
  %850 = vmatprep.subr.mxu0 0.0
  %851 = vmatpush1.msra.mxu0 0.0
  %852 = vmatprep.subr.mxu0 0.0
  %853 = vmatpush1.msra.mxu0 0.0
  %854 = vmatprep.subr.mxu0 0.0
  %855 = vmatpush1.msra.mxu0 0.0
  %856 = vmatprep.mubr.f32.mxu0 0.0
  %857 = vmatmul.mubr.f32.gmra.mrb[0].mxu0 %v790
  %v858 = vpop.f32.mrb[0].mxu0
  %v859 = vadd.f32 %v786, %v858
  %v860 = vpop.f32.mrb[0].mxu0
  %861 = vdwg.mxu0
  %v862 = vld [vmem:[%s1 + $0x78] sm:$0xff]
  %v863 = vld [vmem:[%s1 + $0x80] sm:$0xff]
  %v864 = vld [vmem:[%s1 + $0x88] sm:$0xff]
  %v865 = vld [vmem:[%s1 + $0x90] sm:$0xff]
  %v866 = vld [vmem:[%s1 + $0x98] sm:$0xff]
  %v867 = vld [vmem:[%s1 + $0xa0] sm:$0xff]
  %v868 = vld [vmem:[%s1 + $0xa8] sm:$0xff]
  %v869 = vld [vmem:[%s1 + $0xb0] sm:$0xff]
  %v870 = vld [vmem:[%s1 + $0xb8] sm:$0x1]
  %v872 = vrot.slane %v859, 6
  %873 = vrot.lane.b32.xlu0 %v872, 96
  %v874 = vpop.permute.xlu0 %873
  %v876 = vrot.slane %v859, 4
  %877 = vrot.lane.b32.xlu0 %v876, 64
  %v878 = vpop.permute.xlu0 %877
  %v880 = vrot.slane %v859, 2
  %881 = vrot.lane.b32.xlu0 %v880, 32
  %v882 = vpop.permute.xlu0 %881
  %vm884 = vcmask 1041408
  %v885 = vsel %vm884, %v859, %v874
  %v886 = vsel %vm38, %v885, %v878
  %vm887 = vcmask 1045504
  %v888 = vsel %vm887, %v886, %v882
  %v889 = vlaneseq
  %v890 = vshrl.u32 %v889, 7
  %v891 = vsub.s32 0, %v890
  %v892 = vrot.slane %v870, %v891
  %v894 = vsel %vm688, %v888, 0
  %896 = vmatprep.subr.mxu0 0.0
  %897 = vmatpush1.msra.mxu0 %v862
  %898 = vmatprep.subr.mxu0 0.0
  %899 = vmatpush1.msra.mxu0 %v863
  %900 = vmatprep.subr.mxu0 0.0
  %901 = vmatpush1.msra.mxu0 %v864
  %902 = vmatprep.subr.mxu0 0.0
  %903 = vmatpush1.msra.mxu0 %v865
  %904 = vmatprep.subr.mxu0 0.0
  %905 = vmatpush1.msra.mxu0 0.0
  %906 = vmatprep.subr.mxu0 0.0
  %907 = vmatpush1.msra.mxu0 0.0
  %908 = vmatprep.subr.mxu0 0.0
  %909 = vmatpush1.msra.mxu0 0.0
  %910 = vmatprep.subr.mxu0 0.0
  %911 = vmatpush1.msra.mxu0 0.0
  %912 = vmatprep.subr.mxu0 0.0
  %913 = vmatpush1.msra.mxu0 0.0
  %914 = vmatprep.subr.mxu0 0.0
  %915 = vmatpush1.msra.mxu0 0.0
  %916 = vmatprep.subr.mxu0 0.0
  %917 = vmatpush1.msra.mxu0 0.0
  %918 = vmatprep.subr.mxu0 0.0
  %919 = vmatpush1.msra.mxu0 0.0
  %920 = vmatprep.subr.mxu0 0.0
  %921 = vmatpush1.msra.mxu0 0.0
  %922 = vmatprep.subr.mxu0 0.0
  %923 = vmatpush1.msra.mxu0 0.0
  %924 = vmatprep.subr.mxu0 0.0
  %925 = vmatpush1.msra.mxu0 0.0
  %926 = vmatprep.subr.mxu0 0.0
  %927 = vmatpush1.msra.mxu0 0.0
  %928 = vmatprep.subr.mxu0 0.0
  %929 = vmatpush1.msra.mxu0 0.0
  %930 = vmatprep.subr.mxu0 0.0
  %931 = vmatpush1.msra.mxu0 0.0
  %932 = vmatprep.subr.mxu0 0.0
  %933 = vmatpush1.msra.mxu0 0.0
  %934 = vmatprep.subr.mxu0 0.0
  %935 = vmatpush1.msra.mxu0 0.0
  %936 = vmatprep.subr.mxu0 0.0
  %937 = vmatpush1.msra.mxu0 0.0
  %938 = vmatprep.subr.mxu0 0.0
  %939 = vmatpush1.msra.mxu0 0.0
  %940 = vmatprep.subr.mxu0 0.0
  %941 = vmatpush1.msra.mxu0 0.0
  %942 = vmatprep.subr.mxu0 0.0
  %943 = vmatpush1.msra.mxu0 0.0
  %944 = vmatprep.subr.mxu0 0.0
  %945 = vmatpush1.msra.mxu0 0.0
  %946 = vmatprep.subr.mxu0 0.0
  %947 = vmatpush1.msra.mxu0 0.0
  %948 = vmatprep.subr.mxu0 0.0
  %949 = vmatpush1.msra.mxu0 0.0
  %950 = vmatprep.subr.mxu0 0.0
  %951 = vmatpush1.msra.mxu0 0.0
  %952 = vmatprep.subr.mxu0 0.0
  %953 = vmatpush1.msra.mxu0 0.0
  %954 = vmatprep.subr.mxu0 0.0
  %955 = vmatpush1.msra.mxu0 0.0
  %956 = vmatprep.subr.mxu0 0.0
  %957 = vmatpush1.msra.mxu0 0.0
  %958 = vmatprep.subr.mxu0 0.0
  %959 = vmatpush1.msra.mxu0 0.0
  %960 = vmatprep.mubr.f32.mxu0 0.0
  %961 = vmatmul.mubr.f32.gmra.mrb[0].mxu0 %v894
  %v962 = vpop.f32.mrb[0].mxu0
  %v963 = vadd.f32 %v892, %v962
  %v964 = vpop.f32.mrb[0].mxu0
  %965 = vdwg.mxu0
  %v966 = vmul.f32 %v963, 0.5
  %v967 = vtanh.pop %v966
  %v968 = vmul.f32 %v967, 0.5
  %v969 = vadd.f32 %v968, 0.5
  %v970 = vtanh.pop %v963
  %972 = vrot.lane.b32.xlu0 %v970, 32
  %v973 = vpop.permute.xlu0 %972
  %v975 = vmul.f32 %v969, %v973
  %v976 = vtanh.pop %v975
  %978 = vrot.lane.b32.xlu0 %v976, 64
  %v979 = vpop.permute.xlu0 %978
  %v981 = vmul.f32 %v969, %v979
  %983 = vrot.lane.b32.xlu0 %v981, 64
  %v984 = vpop.permute.xlu0 %983
  %v985 = vsel %vm688, %v984, 0
  %987 = vmatprep.subr.mxu0 0.0
  %988 = vmatpush1.msra.mxu0 %v866
  %989 = vmatprep.subr.mxu0 0.0
  %990 = vmatpush1.msra.mxu0 %v867
  %991 = vmatprep.subr.mxu0 0.0
  %992 = vmatpush1.msra.mxu0 %v868
  %993 = vmatprep.subr.mxu0 0.0
  %994 = vmatpush1.msra.mxu0 %v869
  %995 = vmatprep.subr.mxu0 0.0
  %996 = vmatpush1.msra.mxu0 0.0
  %997 = vmatprep.subr.mxu0 0.0
  %998 = vmatpush1.msra.mxu0 0.0
  %999 = vmatprep.subr.mxu0 0.0
  %1000 = vmatpush1.msra.mxu0 0.0
  %1001 = vmatprep.subr.mxu0 0.0
  %1002 = vmatpush1.msra.mxu0 0.0
  %1003 = vmatprep.subr.mxu0 0.0
  %1004 = vmatpush1.msra.mxu0 0.0
  %1005 = vmatprep.subr.mxu0 0.0
  %1006 = vmatpush1.msra.mxu0 0.0
  %1007 = vmatprep.subr.mxu0 0.0
  %1008 = vmatpush1.msra.mxu0 0.0
  %1009 = vmatprep.subr.mxu0 0.0
  %1010 = vmatpush1.msra.mxu0 0.0
  %1011 = vmatprep.subr.mxu0 0.0
  %1012 = vmatpush1.msra.mxu0 0.0
  %1013 = vmatprep.subr.mxu0 0.0
  %1014 = vmatpush1.msra.mxu0 0.0
  %1015 = vmatprep.subr.mxu0 0.0
  %1016 = vmatpush1.msra.mxu0 0.0
  %1017 = vmatprep.subr.mxu0 0.0
  %1018 = vmatpush1.msra.mxu0 0.0
  %1019 = vmatprep.subr.mxu0 0.0
  %1020 = vmatpush1.msra.mxu0 0.0
  %1021 = vmatprep.subr.mxu0 0.0
  %1022 = vmatpush1.msra.mxu0 0.0
  %1023 = vmatprep.subr.mxu0 0.0
  %1024 = vmatpush1.msra.mxu0 0.0
  %1025 = vmatprep.subr.mxu0 0.0
  %1026 = vmatpush1.msra.mxu0 0.0
  %1027 = vmatprep.subr.mxu0 0.0
  %1028 = vmatpush1.msra.mxu0 0.0
  %1029 = vmatprep.subr.mxu0 0.0
  %1030 = vmatpush1.msra.mxu0 0.0
  %1031 = vmatprep.subr.mxu0 0.0
  %1032 = vmatpush1.msra.mxu0 0.0
  %1033 = vmatprep.subr.mxu0 0.0
  %1034 = vmatpush1.msra.mxu0 0.0
  %1035 = vmatprep.subr.mxu0 0.0
  %1036 = vmatpush1.msra.mxu0 0.0
  %1037 = vmatprep.subr.mxu0 0.0
  %1038 = vmatpush1.msra.mxu0 0.0
  %1039 = vmatprep.subr.mxu0 0.0
  %1040 = vmatpush1.msra.mxu0 0.0
  %1041 = vmatprep.subr.mxu0 0.0
  %1042 = vmatpush1.msra.mxu0 0.0
  %1043 = vmatprep.subr.mxu0 0.0
  %1044 = vmatpush1.msra.mxu0 0.0
  %1045 = vmatprep.subr.mxu0 0.0
  %1046 = vmatpush1.msra.mxu0 0.0
  %1047 = vmatprep.subr.mxu0 0.0
  %1048 = vmatpush1.msra.mxu0 0.0
  %1049 = vmatprep.subr.mxu0 0.0
  %1050 = vmatpush1.msra.mxu0 0.0
  %1051 = vmatprep.mubr.f32.mxu0 0.0
  %1052 = vmatmul.mubr.f32.gmra.mrb[0].mxu0 %v985
  %v1053 = vpop.f32.mrb[0].mxu0
  %v1054 = vadd.f32 0.0, %v1053
  %v1055 = vpop.f32.mrb[0].mxu0
  %1056 = vdwg.mxu0
  %v1058 = vrot.slane %v1054, 6
  %v1060 = vadd.f32 %v963, %v1058
  %v1061 = vmul.f32 %v1060, 0.5
  %v1062 = vtanh.pop %v1061
  %v1063 = vmul.f32 %v1062, 0.5
  %v1064 = vadd.f32 %v1063, 0.5
  %v1065 = vtanh.pop %v1060
  %v1067 = vrot.slane %v975, 6
  %1068 = vrot.lane.b32.xlu0 %v1067, 32
  %v1069 = vpop.permute.xlu0 %1068
  %v1071 = vmul.f32 %v1064, %v1069
  %1073 = vrot.lane.b32.xlu0 %v1065, 32
  %v1074 = vpop.permute.xlu0 %1073
  %v1076 = vmul.f32 %v1064, %v1074
  %1078 = vrot.lane.b32.xlu0 %v1076, 32
  %v1079 = vpop.permute.xlu0 %1078
  %v1081 = vadd.f32 %v1071, %v1079
  %v1082 = vtanh.pop %v1081
  %1084 = vrot.lane.b32.xlu0 %v1082, 32
  %v1085 = vpop.permute.xlu0 %1084
  %v1087 = vmul.f32 %v1064, %v1085
  %v1089 = vrot.slane %v1087, 2
  %1090 = vrot.lane.b32.xlu0 %v1089, 64
  %v1091 = vpop.permute.xlu0 %1090
  %v1092 = vsel %vm688, %v1091, 0
  %1094 = vmatprep.subr.mxu0 0.0
  %1095 = vmatpush1.msra.mxu0 %v866
  %1096 = vmatprep.subr.mxu0 0.0
  %1097 = vmatpush1.msra.mxu0 %v867
  %1098 = vmatprep.subr.mxu0 0.0
  %1099 = vmatpush1.msra.mxu0 %v868
  %1100 = vmatprep.subr.mxu0 0.0
  %1101 = vmatpush1.msra.mxu0 %v869
  %1102 = vmatprep.subr.mxu0 0.0
  %1103 = vmatpush1.msra.mxu0 0.0
  %1104 = vmatprep.subr.mxu0 0.0
  %1105 = vmatpush1.msra.mxu0 0.0
  %1106 = vmatprep.subr.mxu0 0.0
  %1107 = vmatpush1.msra.mxu0 0.0
  %1108 = vmatprep.subr.mxu0 0.0
  %1109 = vmatpush1.msra.mxu0 0.0
  %1110 = vmatprep.subr.mxu0 0.0
  %1111 = vmatpush1.msra.mxu0 0.0
  %1112 = vmatprep.subr.mxu0 0.0
  %1113 = vmatpush1.msra.mxu0 0.0
  %1114 = vmatprep.subr.mxu0 0.0
  %1115 = vmatpush1.msra.mxu0 0.0
  %1116 = vmatprep.subr.mxu0 0.0
  %1117 = vmatpush1.msra.mxu0 0.0
  %1118 = vmatprep.subr.mxu0 0.0
  %1119 = vmatpush1.msra.mxu0 0.0
  %1120 = vmatprep.subr.mxu0 0.0
  %1121 = vmatpush1.msra.mxu0 0.0
  %1122 = vmatprep.subr.mxu0 0.0
  %1123 = vmatpush1.msra.mxu0 0.0
  %1124 = vmatprep.subr.mxu0 0.0
  %1125 = vmatpush1.msra.mxu0 0.0
  %1126 = vmatprep.subr.mxu0 0.0
  %1127 = vmatpush1.msra.mxu0 0.0
  %1128 = vmatprep.subr.mxu0 0.0
  %1129 = vmatpush1.msra.mxu0 0.0
  %1130 = vmatprep.subr.mxu0 0.0
  %1131 = vmatpush1.msra.mxu0 0.0
  %1132 = vmatprep.subr.mxu0 0.0
  %1133 = vmatpush1.msra.mxu0 0.0
  %1134 = vmatprep.subr.mxu0 0.0
  %1135 = vmatpush1.msra.mxu0 0.0
  %1136 = vmatprep.subr.mxu0 0.0
  %1137 = vmatpush1.msra.mxu0 0.0
  %1138 = vmatprep.subr.mxu0 0.0
  %1139 = vmatpush1.msra.mxu0 0.0
  %1140 = vmatprep.subr.mxu0 0.0
  %1141 = vmatpush1.msra.mxu0 0.0
  %1142 = vmatprep.subr.mxu0 0.0
  %1143 = vmatpush1.msra.mxu0 0.0
  %1144 = vmatprep.subr.mxu0 0.0
  %1145 = vmatpush1.msra.mxu0 0.0
  %1146 = vmatprep.subr.mxu0 0.0
  %1147 = vmatpush1.msra.mxu0 0.0
  %1148 = vmatprep.subr.mxu0 0.0
  %1149 = vmatpush1.msra.mxu0 0.0
  %1150 = vmatprep.subr.mxu0 0.0
  %1151 = vmatpush1.msra.mxu0 0.0
  %1152 = vmatprep.subr.mxu0 0.0
  %1153 = vmatpush1.msra.mxu0 0.0
  %1154 = vmatprep.subr.mxu0 0.0
  %1155 = vmatpush1.msra.mxu0 0.0
  %1156 = vmatprep.subr.mxu0 0.0
  %1157 = vmatpush1.msra.mxu0 0.0
  %1158 = vmatprep.mubr.f32.mxu0 0.0
  %1159 = vmatmul.mubr.f32.gmra.mrb[0].mxu0 %v1092
  %v1160 = vpop.f32.mrb[0].mxu0
  %v1161 = vadd.f32 0.0, %v1160
  %v1162 = vpop.f32.mrb[0].mxu0
  %1163 = vdwg.mxu0
  %v1165 = vrot.slane %v1161, 4
  %v1167 = vadd.f32 %v963, %v1165
  %v1168 = vmul.f32 %v1167, 0.5
  %v1169 = vtanh.pop %v1168
  %v1170 = vmul.f32 %v1169, 0.5
  %v1171 = vadd.f32 %v1170, 0.5
  %v1172 = vtanh.pop %v1167
  %v1174 = vrot.slane %v1081, 6
  %v1176 = vmul.f32 %v1171, %v1174
  %1178 = vrot.lane.b32.xlu0 %v1172, 32
  %v1179 = vpop.permute.xlu0 %1178
  %v1181 = vmul.f32 %v1171, %v1179
  %1183 = vrot.lane.b32.xlu0 %v1181, 32
  %v1184 = vpop.permute.xlu0 %1183
  %v1186 = vadd.f32 %v1176, %v1184
  %v1187 = vtanh.pop %v1186
  %1189 = vrot.lane.b32.xlu0 %v1187, 32
  %v1190 = vpop.permute.xlu0 %1189
  %v1192 = vmul.f32 %v1171, %v1190
  %v1194 = vrot.slane %v1192, 4
  %1195 = vrot.lane.b32.xlu0 %v1194, 64
  %v1196 = vpop.permute.xlu0 %1195
  %v1197 = vsel %vm688, %v1196, 0
  %1199 = vmatprep.subr.mxu0 0.0
  %1200 = vmatpush1.msra.mxu0 %v866
  %1201 = vmatprep.subr.mxu0 0.0
  %1202 = vmatpush1.msra.mxu0 %v867
  %1203 = vmatprep.subr.mxu0 0.0
  %1204 = vmatpush1.msra.mxu0 %v868
  %1205 = vmatprep.subr.mxu0 0.0
  %1206 = vmatpush1.msra.mxu0 %v869
  %1207 = vmatprep.subr.mxu0 0.0
  %1208 = vmatpush1.msra.mxu0 0.0
  %1209 = vmatprep.subr.mxu0 0.0
  %1210 = vmatpush1.msra.mxu0 0.0
  %1211 = vmatprep.subr.mxu0 0.0
  %1212 = vmatpush1.msra.mxu0 0.0
  %1213 = vmatprep.subr.mxu0 0.0
  %1214 = vmatpush1.msra.mxu0 0.0
  %1215 = vmatprep.subr.mxu0 0.0
  %1216 = vmatpush1.msra.mxu0 0.0
  %1217 = vmatprep.subr.mxu0 0.0
  %1218 = vmatpush1.msra.mxu0 0.0
  %1219 = vmatprep.subr.mxu0 0.0
  %1220 = vmatpush1.msra.mxu0 0.0
  %1221 = vmatprep.subr.mxu0 0.0
  %1222 = vmatpush1.msra.mxu0 0.0
  %1223 = vmatprep.subr.mxu0 0.0
  %1224 = vmatpush1.msra.mxu0 0.0
  %1225 = vmatprep.subr.mxu0 0.0
  %1226 = vmatpush1.msra.mxu0 0.0
  %1227 = vmatprep.subr.mxu0 0.0
  %1228 = vmatpush1.msra.mxu0 0.0
  %1229 = vmatprep.subr.mxu0 0.0
  %1230 = vmatpush1.msra.mxu0 0.0
  %1231 = vmatprep.subr.mxu0 0.0
  %1232 = vmatpush1.msra.mxu0 0.0
  %1233 = vmatprep.subr.mxu0 0.0
  %1234 = vmatpush1.msra.mxu0 0.0
  %1235 = vmatprep.subr.mxu0 0.0
  %1236 = vmatpush1.msra.mxu0 0.0
  %1237 = vmatprep.subr.mxu0 0.0
  %1238 = vmatpush1.msra.mxu0 0.0
  %1239 = vmatprep.subr.mxu0 0.0
  %1240 = vmatpush1.msra.mxu0 0.0
  %1241 = vmatprep.subr.mxu0 0.0
  %1242 = vmatpush1.msra.mxu0 0.0
  %1243 = vmatprep.subr.mxu0 0.0
  %1244 = vmatpush1.msra.mxu0 0.0
  %1245 = vmatprep.subr.mxu0 0.0
  %1246 = vmatpush1.msra.mxu0 0.0
  %1247 = vmatprep.subr.mxu0 0.0
  %1248 = vmatpush1.msra.mxu0 0.0
  %1249 = vmatprep.subr.mxu0 0.0
  %1250 = vmatpush1.msra.mxu0 0.0
  %1251 = vmatprep.subr.mxu0 0.0
  %1252 = vmatpush1.msra.mxu0 0.0
  %1253 = vmatprep.subr.mxu0 0.0
  %1254 = vmatpush1.msra.mxu0 0.0
  %1255 = vmatprep.subr.mxu0 0.0
  %1256 = vmatpush1.msra.mxu0 0.0
  %1257 = vmatprep.subr.mxu0 0.0
  %1258 = vmatpush1.msra.mxu0 0.0
  %1259 = vmatprep.subr.mxu0 0.0
  %1260 = vmatpush1.msra.mxu0 0.0
  %1261 = vmatprep.subr.mxu0 0.0
  %1262 = vmatpush1.msra.mxu0 0.0
  %1263 = vmatprep.mubr.f32.mxu0 0.0
  %1264 = vmatmul.mubr.f32.gmra.mrb[0].mxu0 %v1197
  %v1265 = vpop.f32.mrb[0].mxu0
  %v1266 = vadd.f32 0.0, %v1265
  %v1267 = vpop.f32.mrb[0].mxu0
  %1268 = vdwg.mxu0
  %v1270 = vrot.slane %v1266, 2
  %v1272 = vadd.f32 %v963, %v1270
  %v1273 = vmul.f32 %v1272, 0.5
  %v1274 = vtanh.pop %v1273
  %v1275 = vmul.f32 %v1274, 0.5
  %v1276 = vadd.f32 %v1275, 0.5
  %v1277 = vtanh.pop %v1272
  %v1279 = vrot.slane %v1186, 6
  %v1281 = vmul.f32 %v1276, %v1279
  %1283 = vrot.lane.b32.xlu0 %v1277, 32
  %v1284 = vpop.permute.xlu0 %1283
  %v1286 = vmul.f32 %v1276, %v1284
  %1288 = vrot.lane.b32.xlu0 %v1286, 32
  %v1289 = vpop.permute.xlu0 %1288
  %v1291 = vadd.f32 %v1281, %v1289
  %v1292 = vtanh.pop %v1291
  %1294 = vrot.lane.b32.xlu0 %v1292, 32
  %v1295 = vpop.permute.xlu0 %1294
  %v1297 = vmul.f32 %v1276, %v1295
  %v1298 = vsel %vm884, %v981, %v1087
  %v1299 = vsel %vm38, %v1298, %v1192
  %v1300 = vsel %vm887, %v1299, %v1297
  %v1301 = vld [vmem:[%s1 + $0xc0] sm:$0xff]
  %v1302 = vld [vmem:[%s1 + $0xc8] sm:$0xff]
  %v1303 = vld [vmem:[%s1 + $0xd0] sm:$0xff]
  %v1304 = vld [vmem:[%s1 + $0xd8] sm:$0xff]
  %v1305 = vld [vmem:[%s1 + $0xe0] sm:$0x1]
  %v1306 = vlaneseq
  %v1307 = vshrl.u32 %v1306, 7
  %v1308 = vsub.s32 0, %v1307
  %v1309 = vrot.slane %v1305, %v1308
  %1311 = vrot.lane.b32.xlu0 %v1300, 64
  %v1312 = vpop.permute.xlu0 %1311
  %v1313 = vsel %vm688, %v1312, 0
  %1315 = vmatprep.subr.mxu0 0.0
  %1316 = vmatpush1.msra.mxu0 %v1301
  %1317 = vmatprep.subr.mxu0 0.0
  %1318 = vmatpush1.msra.mxu0 %v1302
  %1319 = vmatprep.subr.mxu0 0.0
  %1320 = vmatpush1.msra.mxu0 %v1303
  %1321 = vmatprep.subr.mxu0 0.0
  %1322 = vmatpush1.msra.mxu0 %v1304
  %1323 = vmatprep.subr.mxu0 0.0
  %1324 = vmatpush1.msra.mxu0 0.0
  %1325 = vmatprep.subr.mxu0 0.0
  %1326 = vmatpush1.msra.mxu0 0.0
  %1327 = vmatprep.subr.mxu0 0.0
  %1328 = vmatpush1.msra.mxu0 0.0
  %1329 = vmatprep.subr.mxu0 0.0
  %1330 = vmatpush1.msra.mxu0 0.0
  %1331 = vmatprep.subr.mxu0 0.0
  %1332 = vmatpush1.msra.mxu0 0.0
  %1333 = vmatprep.subr.mxu0 0.0
  %1334 = vmatpush1.msra.mxu0 0.0
  %1335 = vmatprep.subr.mxu0 0.0
  %1336 = vmatpush1.msra.mxu0 0.0
  %1337 = vmatprep.subr.mxu0 0.0
  %1338 = vmatpush1.msra.mxu0 0.0
  %1339 = vmatprep.subr.mxu0 0.0
  %1340 = vmatpush1.msra.mxu0 0.0
  %1341 = vmatprep.subr.mxu0 0.0
  %1342 = vmatpush1.msra.mxu0 0.0
  %1343 = vmatprep.subr.mxu0 0.0
  %1344 = vmatpush1.msra.mxu0 0.0
  %1345 = vmatprep.subr.mxu0 0.0
  %1346 = vmatpush1.msra.mxu0 0.0
  %1347 = vmatprep.subr.mxu0 0.0
  %1348 = vmatpush1.msra.mxu0 0.0
  %1349 = vmatprep.subr.mxu0 0.0
  %1350 = vmatpush1.msra.mxu0 0.0
  %1351 = vmatprep.subr.mxu0 0.0
  %1352 = vmatpush1.msra.mxu0 0.0
  %1353 = vmatprep.subr.mxu0 0.0
  %1354 = vmatpush1.msra.mxu0 0.0
  %1355 = vmatprep.subr.mxu0 0.0
  %1356 = vmatpush1.msra.mxu0 0.0
  %1357 = vmatprep.subr.mxu0 0.0
  %1358 = vmatpush1.msra.mxu0 0.0
  %1359 = vmatprep.subr.mxu0 0.0
  %1360 = vmatpush1.msra.mxu0 0.0
  %1361 = vmatprep.subr.mxu0 0.0
  %1362 = vmatpush1.msra.mxu0 0.0
  %1363 = vmatprep.subr.mxu0 0.0
  %1364 = vmatpush1.msra.mxu0 0.0
  %1365 = vmatprep.subr.mxu0 0.0
  %1366 = vmatpush1.msra.mxu0 0.0
  %1367 = vmatprep.subr.mxu0 0.0
  %1368 = vmatpush1.msra.mxu0 0.0
  %1369 = vmatprep.subr.mxu0 0.0
  %1370 = vmatpush1.msra.mxu0 0.0
  %1371 = vmatprep.subr.mxu0 0.0
  %1372 = vmatpush1.msra.mxu0 0.0
  %1373 = vmatprep.subr.mxu0 0.0
  %1374 = vmatpush1.msra.mxu0 0.0
  %1375 = vmatprep.subr.mxu0 0.0
  %1376 = vmatpush1.msra.mxu0 0.0
  %1377 = vmatprep.subr.mxu0 0.0
  %1378 = vmatpush1.msra.mxu0 0.0
  %1379 = vmatprep.mubr.f32.mxu0 0.0
  %1380 = vmatmul.mubr.f32.gmra.mrb[0].mxu0 %v1313
  %v1381 = vpop.f32.mrb[0].mxu0
  %v1382 = vadd.f32 %v1309, %v1381
  %v1383 = vpop.f32.mrb[0].mxu0
  %1384 = vdwg.mxu0
  %1385 = vst [vmem:[%s2] sm:$0xff] %v1382
  // Predicated region
  $region10: #{seq2seq_forward.1} parent=0 // pred_check
    _
  $region11: #{seq2seq_forward.1} parent=0 // pred_check_branch
    %1387 = sbr.rel (0) target = $region13
  $region12: #{seq2seq_forward.1} parent=0 // pred_region
    _
  $region13: #{seq2seq_forward.1} parent=0 // pred_fallthru
    _
  // Predicated region
  $region14: #{seq2seq_forward.1} parent=0 // pred_check
    _
  $region15: #{seq2seq_forward.1} parent=0 // pred_check_branch
    %1389 = sbr.rel (0) target = $region17
  $region16: #{seq2seq_forward.1} parent=0 // pred_region
    _
  $region17: #{seq2seq_forward.1} parent=0 // pred_fallthru
    _

</llo_original>
